<compile_context>
chip_gen: v5e
topology: v5e:2x2
jax: 0.10.0
libtpu: 0.0.40
codegen_flags: <defaults>
</compile_context>

<pallas_src>
import functools
import math

import jax
import jax.numpy as jnp
from jax import lax
from jax.experimental import pallas as pl
from jax.experimental.pallas import tpu as pltpu

_LANE = 128


def _round_up(x, m):
    return ((x + m - 1) // m) * m


def _lane_pad(n):
    return _round_up(max(int(n), 1), _LANE)


def _raymarch_kernel(dens_ref, len_ref, feat_ref, out_ref, *,
                     n_points, n_feat, shift, white_bg, eps):
    """One ray tile.  dens/len: (TR, P), feat: (TR, P*F) point-major, out: (TR, F+1)."""
    P, F = n_points, n_feat
    PF = P * F

    d = dens_ref[...].astype(jnp.float32)        # (TR, P)
    lens = len_ref[...].astype(jnp.float32)      # (TR, P)
    feat = feat_ref[...].astype(jnp.float32)     # (TR, PF)

    # ---- shifted cumprod of (1 + eps - d) along the point (lane) axis -------------
    x = 1.0 + eps - d
    col_p = lax.broadcasted_iota(jnp.int32, x.shape, 1)
    cp = x
    off = 1
    while off < P:                               # log2(P) XLU rolls + fused masked mults
        rolled = pltpu.roll(cp, shift=off, axis=1)
        cp = jnp.where(col_p >= off, cp * rolled, cp)
        off *= 2
    if shift >= P:
        absorption = jnp.ones_like(cp)
    elif shift > 0:
        absorption = jnp.where(col_p >= shift, pltpu.roll(cp, shift=shift, axis=1), 1.0)
    else:
        absorption = cp

    weights = d * absorption                                        # (TR, P)
    alpha = jnp.sum(weights, axis=1, keepdims=True)                 # (TR, 1)
    one_minus_alpha = 1.0 - alpha
    depth = (jnp.sum(weights * lens, axis=1, keepdims=True)
             + one_minus_alpha * lens[:, P - 1:P])                  # (TR, 1)

    # ---- expand weights onto the interleaved feature columns via the MXU ----------
    # w_exp[:, p*F + f] = weights[:, p];   expand[p, c] = 1 iff c in [p*F, p*F + F)
    if F == 1:
        w_exp = weights
    else:
        p_row = lax.broadcasted_iota(jnp.int32, (P, PF), 0)
        c_col = lax.broadcasted_iota(jnp.int32, (P, PF), 1)
        start = p_row * F
        expand_bf = jnp.where((c_col >= start) & (c_col < start + F),
                              1.0, 0.0).astype(jnp.bfloat16)
        # 3 x bf16 split: every column of `expand_bf` has exactly one nonzero, so each
        # pass copies its bf16 piece exactly through the MXU (f32 accumulation); the
        # sum of pieces recovers `weights` to ~f32 accuracy irrespective of how the
        # backend implements f32 matmuls.
        w_exp = jnp.zeros((d.shape[0], PF), jnp.float32)
        w_rem = weights
        for _ in range(3):
            w_bf = w_rem.astype(jnp.bfloat16)
            w_exp = w_exp + jnp.dot(w_bf, expand_bf,
                                    preferred_element_type=jnp.float32)
            w_rem = w_rem - w_bf.astype(jnp.float32)

    wf = w_exp * feat                                                # (TR, PF)

    # ---- exact stride-F tree sum over points: feats[:, f] = sum_p wf[:, p*F + f] ---
    pow2 = (P & (P - 1)) == 0
    col_pf = None if pow2 else lax.broadcasted_iota(jnp.int32, wf.shape, 1)
    acc = wf
    off = 1
    while off < P:
        # brings acc[:, c + off*F] into column c (circular; wrap is masked / harmless)
        rolled = pltpu.roll(acc, shift=PF - off * F, axis=1)
        if pow2:
            acc = acc + rolled
        else:
            acc = acc + jnp.where(col_pf + off * F < PF, rolled, 0.0)
        off *= 2
    feats = acc[:, 0:F]                                              # (TR, F)
    if white_bg:
        feats = feats + one_minus_alpha

    out_ref[:, 0:F] = feats.astype(out_ref.dtype)
    out_ref[:, F:F + 1] = depth.astype(out_ref.dtype)


def nerf_ea_raymarcher(rays_densities, rays_features, lengths, *,
                       white_bg=True, surface_thickness=1, eps=1e-10,
                       out_dtype=jnp.float32, input_dtype=None):
    """EA raymarcher forward: returns concat(features, depth) of shape (..., F+1)."""
    # TODO(synk): _check_raymarcher_inputs / _check_density_bounds are runtime asserts
    #             in torch; skipped here.
    *lead, P, one = rays_densities.shape
    assert one == 1, "rays_densities must have a trailing singleton dim"
    P = int(P)
    F = int(rays_features.shape[-1])
    R = int(math.prod(lead)) if lead else 1

    # Native-layout, copy-free views: the pallas_call is the only HBM pass.
    d2 = rays_densities.reshape(R, P)
    l2 = lengths.reshape(R, P)
    f2 = rays_features.reshape(R, P * F)
    if input_dtype is not None:                  # opt-in (e.g. bf16) to halve HBM bytes
        d2, l2, f2 = (a.astype(input_dtype) for a in (d2, l2, f2))

    # ---- ray-tile size TR from the per-generation VMEM budget ---------------------
    try:
        vmem_cap = int(pltpu.get_tpu_info().vmem_capacity_bytes)
    except Exception:
        vmem_cap = 64 << 20                      # v7x-safe fallback
    out_item = jnp.dtype(out_dtype).itemsize
    io_per_row = 2 * (_lane_pad(P) * d2.dtype.itemsize          # double-buffered DMA
                      + _lane_pad(P) * l2.dtype.itemsize
                      + _lane_pad(P * F) * f2.dtype.itemsize
                      + _lane_pad(F + 1) * out_item)
    tmp_per_row = 4 * (4 * _lane_pad(P) + 3 * _lane_pad(P * F))  # f32 in-kernel temps
    per_row = io_per_row + tmp_per_row
    fixed = 2 * _round_up(P, 8) * _lane_pad(P * F) * 4           # expansion matrix etc.

    budget = int(0.45 * vmem_cap)                                # ~half of VMEM
    tr = max(8, (budget - fixed) // per_row)
    tr = (tr // 128) * 128 if tr >= 256 else max(8, (tr // 8) * 8)
    tr = int(min(tr, 4096))
    # Keep the "parallel" grid >= 2 steps when R allows it (both v7x TensorCores work).
    tr_split = _round_up(pl.cdiv(_round_up(R, 8), 2), 8)
    TR = int(max(8, min(tr, tr_split)))
    grid = (pl.cdiv(R, TR),)                     # partial last tile: OOB writes dropped

    vmem_limit = int(min(0.85 * vmem_cap, max(32 << 20, 2 * (fixed + TR * per_row))))

    log2p = max(1, math.ceil(math.log2(P))) if P > 1 else 1
    flops_per_ray = (P * (3 * log2p + 12)
                     + (0 if F == 1 else 6 * P * P * F)          # 3 bf16 expansion passes
                     + P * F * (2 * log2p + 3) + 4 * (F + 1))
    bytes_accessed = (R * P * (d2.dtype.itemsize + l2.dtype.itemsize)
                      + R * P * F * f2.dtype.itemsize
                      + R * (F + 1) * out_item)
    cost = pl.CostEstimate(flops=int(R * flops_per_ray), transcendentals=0,
                           bytes_accessed=int(bytes_accessed))

    kernel = functools.partial(_raymarch_kernel, n_points=P, n_feat=F,
                               shift=int(surface_thickness), white_bg=bool(white_bg),
                               eps=float(eps))

    # NOTE: densities/lengths could be passed pre-stacked as one (R, 2P) operand to
    # save one (small) DMA per grid step; kept separate here to avoid an HBM concat.
    out2 = pl.pallas_call(
        kernel,
        out_shape=jax.ShapeDtypeStruct((R, F + 1), out_dtype),
        grid_spec=pltpu.PrefetchScalarGridSpec(
            num_scalar_prefetch=0,
            grid=grid,
            in_specs=[
                pl.BlockSpec((TR, P), lambda i: (i, 0)),
                pl.BlockSpec((TR, P), lambda i: (i, 0)),
                pl.BlockSpec((TR, P * F), lambda i: (i, 0)),
            ],
            out_specs=pl.BlockSpec((TR, F + 1), lambda i: (i, 0)),
        ),
        compiler_params=pltpu.CompilerParams(
            dimension_semantics=("parallel",),
            vmem_limit_bytes=vmem_limit,
        ),
        cost_estimate=cost,
    )(d2, l2, f2)

    return out2.reshape(*lead, F + 1)


def _reference(rays_densities, rays_features, lengths, white_bg, shift, eps=1e-10):
    """Pure-JAX reference mirroring the PyTorch forward."""
    d = rays_densities[..., 0]
    x = 1.0 + eps - d
    cp = jnp.cumprod(x, axis=-1)
    absorption = jnp.concatenate(
        [jnp.ones_like(cp[..., :shift]), cp[..., :-shift]], axis=-1)
    weights = d * absorption
    features = (weights[..., None] * rays_features).sum(-2)
    depths = (weights[..., None] * lengths[..., None]).sum(-2)
    pix_alpha = weights.sum(-1)
    if white_bg:
        features = features + 1.0 - pix_alpha[..., None]
    depths = depths + (1.0 - pix_alpha[..., None]) * lengths[..., -1:]
    return jnp.concatenate([features, depths], axis=-1)


if __name__ == "__main__":
    key = jax.random.PRNGKey(0)
    k1, k2, k3 = jax.random.split(key, 3)

    # batch, rays per batch, points per ray, feature dim (R = 200 exercises the
    # non-divisible / partial-tile path — no host-side padding is performed).
    B, N, P, F = 2, 100, 8, 4
    rays_densities = jax.random.uniform(k1, (B, N, P, 1), jnp.float32)     # in [0, 1)
    rays_features = jax.random.uniform(k2, (B, N, P, F), jnp.float32)
    base = jnp.linspace(0.5, 4.0, P, dtype=jnp.float32)
    lengths = base + 0.1 * jax.random.uniform(k3, (B, N, P), jnp.float32)  # ray lengths

    out = nerf_ea_raymarcher(rays_densities, rays_features, lengths,
                             white_bg=True, surface_thickness=1)
    out = jax.block_until_ready(out)

    ref = _reference(rays_densities, rays_features, lengths, True, 1)
    assert out.shape == (B, N, F + 1), out.shape
    err = float(jnp.max(jnp.abs(out - ref)))
    assert jnp.allclose(out, ref, atol=2e-5, rtol=2e-5), err

    print("KERNEL_OK")
</pallas_src>

<mosaic_0001>
module attributes {stable_mosaic.version = 11 : i64} {
  func.func @_raymarch_kernel(%arg0: i32, %arg1: memref<104x8xf32, #tpu.memory_space<vmem>>, %arg2: memref<104x8xf32, #tpu.memory_space<vmem>>, %arg3: memref<104x32xf32, #tpu.memory_space<vmem>>, %arg4: memref<104x5xf32, #tpu.memory_space<vmem>>) attributes {dimension_semantics = [#tpu.dimension_semantics<parallel>], iteration_bounds = array<i64: 2>, scalar_prefetch = 0 : i64, scratch_operands = 0 : i64, tpu.core_type = #tpu.core_type<tc>, window_params = [{transform_indices = @transform_0, window_bounds = array<i64: 104, 8>}, {transform_indices = @transform_1, window_bounds = array<i64: 104, 8>}, {transform_indices = @transform_2, window_bounds = array<i64: 104, 32>}, {transform_indices = @transform_3, window_bounds = array<i64: 104, 5>}]} {
    %c0 = arith.constant 0 : index
    %c0_0 = arith.constant 0 : index
    %0 = vector.load %arg1[%c0, %c0_0] : memref<104x8xf32, #tpu.memory_space<vmem>>, vector<104x8xf32>
    %c0_1 = arith.constant 0 : index
    %c0_2 = arith.constant 0 : index
    %1 = vector.load %arg2[%c0_1, %c0_2] : memref<104x8xf32, #tpu.memory_space<vmem>>, vector<104x8xf32>
    %c0_3 = arith.constant 0 : index
    %c0_4 = arith.constant 0 : index
    %2 = vector.load %arg3[%c0_3, %c0_4] : memref<104x32xf32, #tpu.memory_space<vmem>>, vector<104x32xf32>
    %cst = arith.constant 1.000000e+00 : f32
    %3 = vector.broadcast %cst : f32 to vector<104x8xf32>
    %4 = arith.subf %3, %0 : vector<104x8xf32>
    %5 = tpu.iota {dimensions = array<i32: 1>} : vector<104x8xi32>
    %c1_i32 = arith.constant 1 : i32
    %6 = tpu.dynamic_rotate %4 by %c1_i32 dim 1 : vector<104x8xf32>, i32 -> vector<104x8xf32>
    %c1_i32_5 = arith.constant 1 : i32
    %7 = vector.broadcast %c1_i32_5 : i32 to vector<104x8xi32>
    %8 = arith.cmpi sge, %5, %7 : vector<104x8xi32>
    %9 = arith.mulf %4, %6 : vector<104x8xf32>
    %10 = arith.select %8, %9, %4 : vector<104x8xi1>, vector<104x8xf32>
    %c2_i32 = arith.constant 2 : i32
    %11 = tpu.dynamic_rotate %10 by %c2_i32 dim 1 : vector<104x8xf32>, i32 -> vector<104x8xf32>
    %c2_i32_6 = arith.constant 2 : i32
    %12 = vector.broadcast %c2_i32_6 : i32 to vector<104x8xi32>
    %13 = arith.cmpi sge, %5, %12 : vector<104x8xi32>
    %14 = arith.mulf %10, %11 : vector<104x8xf32>
    %15 = arith.select %13, %14, %10 : vector<104x8xi1>, vector<104x8xf32>
    %c4_i32 = arith.constant 4 : i32
    %16 = tpu.dynamic_rotate %15 by %c4_i32 dim 1 : vector<104x8xf32>, i32 -> vector<104x8xf32>
    %c4_i32_7 = arith.constant 4 : i32
    %17 = vector.broadcast %c4_i32_7 : i32 to vector<104x8xi32>
    %18 = arith.cmpi sge, %5, %17 : vector<104x8xi32>
    %19 = arith.mulf %15, %16 : vector<104x8xf32>
    %20 = arith.select %18, %19, %15 : vector<104x8xi1>, vector<104x8xf32>
    %c1_i32_8 = arith.constant 1 : i32
    %21 = vector.broadcast %c1_i32_8 : i32 to vector<104x8xi32>
    %22 = arith.cmpi sge, %5, %21 : vector<104x8xi32>
    %c1_i32_9 = arith.constant 1 : i32
    %23 = tpu.dynamic_rotate %20 by %c1_i32_9 dim 1 : vector<104x8xf32>, i32 -> vector<104x8xf32>
    %cst_10 = arith.constant 1.000000e+00 : f32
    %24 = vector.broadcast %cst_10 : f32 to vector<104x8xf32>
    %25 = arith.select %22, %23, %24 : vector<104x8xi1>, vector<104x8xf32>
    %26 = arith.mulf %0, %25 : vector<104x8xf32>
    %cst_11 = arith.constant dense<0.000000e+00> : vector<104xf32>
    %27 = vector.multi_reduction <add>, %26, %cst_11 [1] : vector<104x8xf32> to vector<104xf32>
    %28 = vector.shape_cast %27 : vector<104xf32> to vector<104x1xf32>
    %cst_12 = arith.constant 1.000000e+00 : f32
    %29 = vector.broadcast %cst_12 : f32 to vector<104x1xf32>
    %30 = arith.subf %29, %28 : vector<104x1xf32>
    %31 = arith.mulf %26, %1 : vector<104x8xf32>
    %cst_13 = arith.constant dense<0.000000e+00> : vector<104xf32>
    %32 = vector.multi_reduction <add>, %31, %cst_13 [1] : vector<104x8xf32> to vector<104xf32>
    %33 = vector.shape_cast %32 : vector<104xf32> to vector<104x1xf32>
    %34 = vector.extract_strided_slice %1 {offsets = [0, 7], sizes = [104, 1], strides = [1, 1]} : vector<104x8xf32> to vector<104x1xf32>
    %35 = arith.mulf %30, %34 : vector<104x1xf32>
    %36 = arith.addf %33, %35 : vector<104x1xf32>
    %37 = tpu.iota {dimensions = array<i32: 0>} : vector<8x32xi32>
    %38 = tpu.iota {dimensions = array<i32: 1>} : vector<8x32xi32>
    %c4_i32_14 = arith.constant 4 : i32
    %39 = vector.broadcast %c4_i32_14 : i32 to vector<8x32xi32>
    %40 = arith.muli %37, %39 : vector<8x32xi32>
    %41 = arith.cmpi sge, %38, %40 : vector<8x32xi32>
    %c4_i32_15 = arith.constant 4 : i32
    %42 = vector.broadcast %c4_i32_15 : i32 to vector<8x32xi32>
    %43 = arith.addi %40, %42 : vector<8x32xi32>
    %44 = arith.cmpi slt, %38, %43 : vector<8x32xi32>
    %45 = arith.andi %41, %44 : vector<8x32xi1>
    %cst_16 = arith.constant 1.000000e+00 : f32
    %cst_17 = arith.constant 0.000000e+00 : f32
    %46 = vector.broadcast %cst_16 : f32 to vector<8x32xf32>
    %47 = vector.broadcast %cst_17 : f32 to vector<8x32xf32>
    %48 = arith.select %45, %46, %47 : vector<8x32xi1>, vector<8x32xf32>
    %49 = arith.truncf %48 : vector<8x32xf32> to vector<8x32xbf16>
    %cst_18 = arith.constant 0.000000e+00 : f32
    %50 = vector.broadcast %cst_18 : f32 to vector<104x32xf32>
    %51 = arith.truncf %26 : vector<104x8xf32> to vector<104x8xbf16>
    %cst_19 = arith.constant dense<0.000000e+00> : vector<104x32xf32>
    %52 = tpu.matmul %51, %49, %cst_19 {dimension_numbers = #tpu.dot_dimension_numbers<[1], [0], [0], [1], [0, 0, 1, 1], [], []>} : vector<104x8xbf16>, vector<8x32xbf16>, vector<104x32xf32> -> vector<104x32xf32>
    %53 = arith.addf %50, %52 : vector<104x32xf32>
    %54 = arith.extf %51 : vector<104x8xbf16> to vector<104x8xf32>
    %55 = arith.subf %26, %54 : vector<104x8xf32>
    %56 = arith.truncf %55 : vector<104x8xf32> to vector<104x8xbf16>
    %cst_20 = arith.constant dense<0.000000e+00> : vector<104x32xf32>
    %57 = tpu.matmul %56, %49, %cst_20 {dimension_numbers = #tpu.dot_dimension_numbers<[1], [0], [0], [1], [0, 0, 1, 1], [], []>} : vector<104x8xbf16>, vector<8x32xbf16>, vector<104x32xf32> -> vector<104x32xf32>
    %58 = arith.addf %53, %57 : vector<104x32xf32>
    %59 = arith.extf %56 : vector<104x8xbf16> to vector<104x8xf32>
    %60 = arith.subf %55, %59 : vector<104x8xf32>
    %61 = arith.truncf %60 : vector<104x8xf32> to vector<104x8xbf16>
    %cst_21 = arith.constant dense<0.000000e+00> : vector<104x32xf32>
    %62 = tpu.matmul %61, %49, %cst_21 {dimension_numbers = #tpu.dot_dimension_numbers<[1], [0], [0], [1], [0, 0, 1, 1], [], []>} : vector<104x8xbf16>, vector<8x32xbf16>, vector<104x32xf32> -> vector<104x32xf32>
    %63 = arith.addf %58, %62 : vector<104x32xf32>
    %64 = arith.mulf %63, %2 : vector<104x32xf32>
    %c28_i32 = arith.constant 28 : i32
    %65 = tpu.dynamic_rotate %64 by %c28_i32 dim 1 : vector<104x32xf32>, i32 -> vector<104x32xf32>
    %66 = arith.addf %64, %65 : vector<104x32xf32>
    %c24_i32 = arith.constant 24 : i32
    %67 = tpu.dynamic_rotate %66 by %c24_i32 dim 1 : vector<104x32xf32>, i32 -> vector<104x32xf32>
    %68 = arith.addf %66, %67 : vector<104x32xf32>
    %c16_i32 = arith.constant 16 : i32
    %69 = tpu.dynamic_rotate %68 by %c16_i32 dim 1 : vector<104x32xf32>, i32 -> vector<104x32xf32>
    %70 = arith.addf %68, %69 : vector<104x32xf32>
    %71 = vector.extract_strided_slice %70 {offsets = [0, 0], sizes = [104, 4], strides = [1, 1]} : vector<104x32xf32> to vector<104x4xf32>
    %72 = vector.broadcast %30 : vector<104x1xf32> to vector<104x4xf32>
    %73 = arith.addf %71, %72 : vector<104x4xf32>
    %c0_22 = arith.constant 0 : index
    %c0_23 = arith.constant 0 : index
    %74 = vector.load %arg4[%c0_22, %c0_23] : memref<104x5xf32, #tpu.memory_space<vmem>>, vector<104x4xf32>
    tpu.vector_store %arg4[%c0_22, %c0_23], %73 {strides = array<i32>} : memref<104x5xf32, #tpu.memory_space<vmem>>, vector<104x4xf32>,
    %c0_24 = arith.constant 0 : index
    %c4 = arith.constant 4 : index
    %75 = vector.load %arg4[%c0_24, %c4] : memref<104x5xf32, #tpu.memory_space<vmem>>, vector<104x1xf32>
    tpu.vector_store %arg4[%c0_24, %c4], %36 {strides = array<i32>} : memref<104x5xf32, #tpu.memory_space<vmem>>, vector<104x1xf32>,
    return
  }
  func.func @transform_0(%arg0: i32) -> (i32, i32) {
    %c0_i32 = arith.constant 0 : i32
    %c0_i32_0 = arith.constant 0 : i32
    return %arg0, %c0_i32 : i32, i32
  }
  func.func @transform_1(%arg0: i32) -> (i32, i32) {
    %c0_i32 = arith.constant 0 : i32
    %c0_i32_0 = arith.constant 0 : i32
    return %arg0, %c0_i32 : i32, i32
  }
  func.func @transform_2(%arg0: i32) -> (i32, i32) {
    %c0_i32 = arith.constant 0 : i32
    %c0_i32_0 = arith.constant 0 : i32
    return %arg0, %c0_i32 : i32, i32
  }
  func.func @transform_3(%arg0: i32) -> (i32, i32) {
    %c0_i32 = arith.constant 0 : i32
    %c0_i32_0 = arith.constant 0 : i32
    return %arg0, %c0_i32 : i32, i32
  }
}

</mosaic_0001>

<llo_original>
// kernel: tpu_custom_call.1
$region0: #{tpu_custom_call.1}
  #allocation0 [shape = 'u32[]', space=smem, size = 0x4, offset = 0x4, fixed_abs, tag = 'smem constant byte address 0x4 - core index']
  #allocation1 [shape = 'u32[72,128]{1,0:T(1,128)}', space=vmem, size = 0x9000, scoped, tag = 'internal scratch']
  %s0 = inlined_call_operand.vmem [shape: f32[200,8], index: 0, kind: input, shape index: {}]
  %s1 = inlined_call_operand.vmem [shape: f32[200,8], index: 1, kind: input, shape index: {}]
  %s2 = inlined_call_operand.vmem [shape: f32[200,32], index: 2, kind: input, shape index: {}]
  %s3 = inlined_call_operand.vmem [shape: f32[200,5], index: 3, kind: output, shape index: {}]
  %s4 = sld [smem:[#allocation0]]
  $region93: #{tpu_custom_call.1} parent=0
    _
  %s6 = ssub.s32 1, %s4
  %s7 = scalar_select 0, %s6, %s4
  $region1: #{tpu_custom_call.1} parent=0
    #allocation2 [shape = 'u8[106496]{0}', space=vmem, size = 0x1a000, scoped, tag = 'output window, operand 0']
    loop: start=0, step=1, limit=4
    $region2: #{tpu_custom_call.1} parent=1 // loop_pre_header
      _
    $region3: #{tpu_custom_call.1} parent=1 // loop_header
      %s9 = sphi 0, %s13
      %p10 = scmp.ge.s32.totalorder %s9, 4
      %s19 = sphi 0, %s21
      %s22 = sphi 0, %s19
      %s23 = sphi 0, %s22
      %s39 = sphi 0, %s23
      %s45 = sphi 0, %s47
      %s48 = sphi 0, %s45
      %s49 = sphi 0, %s48
      %s65 = sphi 0, %s49
      %s71 = sphi 0, %s73
      %s74 = sphi 0, %s71
      %s75 = sphi 0, %s74
      %s91 = sphi 0, %s75
      %s97 = sphi 0, %s99
      %s100 = sphi 0, %s97
      %s101 = sphi 0, %s100
      %s117 = sphi 0, %s101
    $region4: #{tpu_custom_call.1} parent=1 // loop_header_branch
      %12 = sbr.rel (%p10) target = $region8
    $region5: #{tpu_custom_call.1} parent=1 // loop_body
      %s14 = ssub.s32 %s9, 1
      %s15 = ssub.s32 %s9, 2
      %s16 = sadd.s32 %s9, 1
      %s17 = ssub.s32 %s9, %s16
      %p18 = scmp.eq.s32.totalorder %s17, 0
      %s20 = sadd.s32 %s19, 1
      %s21 = scalar_select %p18, %s19, %s20
      %p24 = pneg %p18
      %p25 = scmp.eq.s32.totalorder %s9, 1
      %p26 = por %p24, %p25
      %p27 = scmp.ne.s32.totalorder %s19, %s22
      %p28 = scmp.eq.s32.totalorder %s9, 0
      %p29 = por %p27, %p28
      %p30 = scmp.ne.s32.totalorder %s19, %s22
      %p31 = scmp.eq.s32.totalorder %s14, 1
      %p32 = por %p30, %p31
      %p33 = scmp.ne.s32.totalorder %s22, %s23
      %p34 = scmp.eq.s32.totalorder %s14, 0
      %p35 = por %p33, %p34
      %p36 = scmp.ne.s32.totalorder %s22, %s23
      %p37 = scmp.eq.s32.totalorder %s15, 1
      %p38 = por %p36, %p37
      %p40 = scmp.ne.s32.totalorder %s23, %s39
      %p41 = scmp.eq.s32.totalorder %s15, 0
      %p42 = por %p40, %p41
      %s43 = ssub.s32 %s9, %s16
      %p44 = scmp.eq.s32.totalorder %s43, 0
      %s46 = sadd.s32 %s45, 1
      %s47 = scalar_select %p44, %s45, %s46
      %p50 = pneg %p44
      %p51 = scmp.eq.s32.totalorder %s9, 1
      %p52 = por %p50, %p51
      %p53 = scmp.ne.s32.totalorder %s45, %s48
      %p54 = scmp.eq.s32.totalorder %s9, 0
      %p55 = por %p53, %p54
      %p56 = scmp.ne.s32.totalorder %s45, %s48
      %p57 = scmp.eq.s32.totalorder %s14, 1
      %p58 = por %p56, %p57
      %p59 = scmp.ne.s32.totalorder %s48, %s49
      %p60 = scmp.eq.s32.totalorder %s14, 0
      %p61 = por %p59, %p60
      %p62 = scmp.ne.s32.totalorder %s48, %s49
      %p63 = scmp.eq.s32.totalorder %s15, 1
      %p64 = por %p62, %p63
      %p66 = scmp.ne.s32.totalorder %s49, %s65
      %p67 = scmp.eq.s32.totalorder %s15, 0
      %p68 = por %p66, %p67
      %s69 = ssub.s32 %s9, %s16
      %p70 = scmp.eq.s32.totalorder %s69, 0
      %s72 = sadd.s32 %s71, 1
      %s73 = scalar_select %p70, %s71, %s72
      %p76 = pneg %p70
      %p77 = scmp.eq.s32.totalorder %s9, 1
      %p78 = por %p76, %p77
      %p79 = scmp.ne.s32.totalorder %s71, %s74
      %p80 = scmp.eq.s32.totalorder %s9, 0
      %p81 = por %p79, %p80
      %p82 = scmp.ne.s32.totalorder %s71, %s74
      %p83 = scmp.eq.s32.totalorder %s14, 1
      %p84 = por %p82, %p83
      %p85 = scmp.ne.s32.totalorder %s74, %s75
      %p86 = scmp.eq.s32.totalorder %s14, 0
      %p87 = por %p85, %p86
      %p88 = scmp.ne.s32.totalorder %s74, %s75
      %p89 = scmp.eq.s32.totalorder %s15, 1
      %p90 = por %p88, %p89
      %p92 = scmp.ne.s32.totalorder %s75, %s91
      %p93 = scmp.eq.s32.totalorder %s15, 0
      %p94 = por %p92, %p93
      %s95 = ssub.s32 %s9, %s16
      %p96 = scmp.eq.s32.totalorder %s95, 0
      %s98 = sadd.s32 %s97, 1
      %s99 = scalar_select %p96, %s97, %s98
      %p102 = pneg %p96
      %p103 = scmp.eq.s32.totalorder %s9, 1
      %p104 = por %p102, %p103
      %p105 = scmp.ne.s32.totalorder %s97, %s100
      %p106 = scmp.eq.s32.totalorder %s9, 0
      %p107 = por %p105, %p106
      %p108 = scmp.ne.s32.totalorder %s97, %s100
      %p109 = scmp.eq.s32.totalorder %s14, 1
      %p110 = por %p108, %p109
      %p111 = scmp.ne.s32.totalorder %s100, %s101
      %p112 = scmp.eq.s32.totalorder %s14, 0
      %p113 = por %p111, %p112
      %p114 = scmp.ne.s32.totalorder %s100, %s101
      %p115 = scmp.eq.s32.totalorder %s15, 1
      %p116 = por %p114, %p115
      %p118 = scmp.ne.s32.totalorder %s101, %s117
      %p119 = scmp.eq.s32.totalorder %s15, 0
      %p120 = por %p118, %p119
      %p121 = scmp.le.s32.totalorder 1, %s9
      %p122 = scmp.lt.s32.totalorder %s9, 3
      %p123 = pnand %p121, %p122
      %p124 = pneg %p123
      // Predicated region
      $region9: #{tpu_custom_call.1} parent=5 // pred_check
        _
      $region10: #{tpu_custom_call.1} parent=5 // pred_check_branch
        %126 = sbr.rel (%p123) target = $region12
      $region11: #{tpu_custom_call.1} parent=5 // pred_region
        %s127 = ssub.s32 %s9, 1
      $region12: #{tpu_custom_call.1} parent=5 // pred_fallthru
        _
      %p128 = scmp.lt.s32.totalorder %s9, 2
      // Predicated region
      $region13: #{tpu_custom_call.1} parent=5 // pred_check
        %p129 = pneg %p128
      $region14: #{tpu_custom_call.1} parent=5 // pred_check_branch
        %131 = sbr.rel (%p129) target = $region16
      $region15: #{tpu_custom_call.1} parent=5 // pred_region
        // Predicated region
        $region17: #{tpu_custom_call.1} parent=15 // pred_check
          %p132 = pneg %p29
        $region18: #{tpu_custom_call.1} parent=15 // pred_check_branch
          %134 = sbr.rel (%p132) target = $region20
        $region19: #{tpu_custom_call.1} parent=15 // pred_region
          %s135 = smul.u32 13, %s9
          %s136 = ssub.s32 25, %s135
          %p137 = scmp.lt.s32.totalorder %s136, 13
          %s138 = scalar_select %p137, %s136, 13
          %s139 = smul.u32 8, %s138
          %p140 = scmp.lt.s32.totalorder %s135, 24
          %s141 = scalar_select %p140, %s135, 24
          %s142 = smul.addr %s141, 8
          %s143 = scalar_lea.vmem %s0, %s142
          %s144 = smul.u32 13, %s9
          %s145 = ssub.s32 25, %s144
          %p146 = scmp.lt.s32.totalorder %s145, 13
          %s147 = scalar_select %p146, %s145, 13
          %s148 = smul.u32 8, %s147
        $region20: #{tpu_custom_call.1} parent=15 // pred_fallthru
          _
        // Predicated region
        $region21: #{tpu_custom_call.1} parent=15 // pred_check
          %p149 = pneg %p55
        $region22: #{tpu_custom_call.1} parent=15 // pred_check_branch
          %151 = sbr.rel (%p149) target = $region24
        $region23: #{tpu_custom_call.1} parent=15 // pred_region
          %s152 = smul.u32 13, %s9
          %s153 = ssub.s32 25, %s152
          %p154 = scmp.lt.s32.totalorder %s153, 13
          %s155 = scalar_select %p154, %s153, 13
          %s156 = smul.u32 8, %s155
          %p157 = scmp.lt.s32.totalorder %s152, 24
          %s158 = scalar_select %p157, %s152, 24
          %s159 = smul.addr %s158, 8
          %s160 = scalar_lea.vmem %s1, %s159
          %s161 = smul.u32 13, %s9
          %s162 = ssub.s32 25, %s161
          %p163 = scmp.lt.s32.totalorder %s162, 13
          %s164 = scalar_select %p163, %s162, 13
          %s165 = smul.u32 8, %s164
        $region24: #{tpu_custom_call.1} parent=15 // pred_fallthru
          _
        // Predicated region
        $region25: #{tpu_custom_call.1} parent=15 // pred_check
          %p166 = pneg %p81
        $region26: #{tpu_custom_call.1} parent=15 // pred_check_branch
          %168 = sbr.rel (%p166) target = $region28
        $region27: #{tpu_custom_call.1} parent=15 // pred_region
          %s169 = smul.u32 13, %s9
          %s170 = ssub.s32 25, %s169
          %p171 = scmp.lt.s32.totalorder %s170, 13
          %s172 = scalar_select %p171, %s170, 13
          %s173 = smul.u32 8, %s172
          %p174 = scmp.lt.s32.totalorder %s169, 24
          %s175 = scalar_select %p174, %s169, 24
          %s176 = smul.addr %s175, 8
          %s177 = scalar_lea.vmem %s2, %s176
          %s178 = smul.u32 13, %s9
          %s179 = ssub.s32 25, %s178
          %p180 = scmp.lt.s32.totalorder %s179, 13
          %s181 = scalar_select %p180, %s179, 13
          %s182 = smul.u32 8, %s181
        $region28: #{tpu_custom_call.1} parent=15 // pred_fallthru
          _
      $region16: #{tpu_custom_call.1} parent=5 // pred_fallthru
        _
      %p183 = scmp.le.s32.totalorder 1, %s9
      %p184 = scmp.lt.s32.totalorder %s9, 3
      %p185 = pnand %p183, %p184
      %p186 = pneg %p185
      // Predicated region
      $region29: #{tpu_custom_call.1} parent=5 // pred_check
        _
      $region30: #{tpu_custom_call.1} parent=5 // pred_check_branch
        %188 = sbr.rel (%p185) target = $region32
      $region31: #{tpu_custom_call.1} parent=5 // pred_region
        %s189 = ssub.s32 %s9, 1
        %s190 = smul.u32 13, %s14
        %s191 = ssub.s32 25, %s190
        %p192 = scmp.lt.s32.totalorder %s191, 13
        %s193 = scalar_select %p192, %s191, 13
        %s194 = smul.u32 8, %s193
        %p195 = scmp.lt.s32.totalorder %s190, 24
        %s196 = scalar_select %p195, %s190, 24
        %s197 = smul.addr %s196, 8
        %s198 = scalar_lea.vmem %s0, %s197
        %p199 = pneg %p35
        %p200 = pneg %p32
        %s201 = smul.u32 13, %s14
        %s202 = ssub.s32 25, %s201
        %p203 = scmp.lt.s32.totalorder %s202, 13
        %s204 = scalar_select %p203, %s202, 13
        %s205 = smul.u32 8, %s204
        %p206 = scmp.lt.s32.totalorder %s201, 24
        %s207 = scalar_select %p206, %s201, 24
        %s208 = smul.addr %s207, 8
        %s209 = scalar_lea.vmem %s1, %s208
        %p210 = pneg %p61
        %p211 = pneg %p58
        %s212 = smul.u32 13, %s14
        %s213 = ssub.s32 25, %s212
        %p214 = scmp.lt.s32.totalorder %s213, 13
        %s215 = scalar_select %p214, %s213, 13
        %s216 = smul.u32 8, %s215
        %p217 = scmp.lt.s32.totalorder %s212, 24
        %s218 = scalar_select %p217, %s212, 24
        %s219 = smul.addr %s218, 8
        %s220 = scalar_lea.vmem %s2, %s219
        %p221 = pneg %p87
        %p222 = pneg %p84
        %p223 = pneg %p113
        %p224 = pneg %p110
        %s225 = sand.u32 %s100, 1
        %s226 = sand.u32 %s100, 1
        %s227 = smul.addr %s226, 104
        %s228 = scalar_lea.vmem [#allocation2], %s227
        %s229 = smul.u32 13, %s14
        %s230 = ssub.s32 25, %s229
        %p231 = scmp.lt.s32.totalorder %s230, 13
        %s232 = scalar_select %p231, %s230, 13
        %s233 = smul.u32 8, %s232
        %p234 = scmp.lt.s32.totalorder %s229, 24
        %s235 = scalar_select %p234, %s229, 24
        %s236 = smul.addr %s235, 8
        %s237 = scalar_lea.vmem %s0, %s236
        %s238 = smul.u32 13, %s14
        %s239 = ssub.s32 25, %s238
        %p240 = scmp.lt.s32.totalorder %s239, 13
        %s241 = scalar_select %p240, %s239, 13
        %s242 = smul.u32 8, %s241
        %s243 = smul.u32 13, %s14
        %s244 = ssub.s32 25, %s243
        %p245 = scmp.lt.s32.totalorder %s244, 13
        %s246 = scalar_select %p245, %s244, 13
        %s247 = smul.u32 8, %s246
        %p248 = scmp.lt.s32.totalorder %s243, 24
        %s249 = scalar_select %p248, %s243, 24
        %s250 = smul.addr %s249, 8
        %s251 = scalar_lea.vmem %s1, %s250
        %s252 = smul.u32 13, %s14
        %s253 = ssub.s32 25, %s252
        %p254 = scmp.lt.s32.totalorder %s253, 13
        %s255 = scalar_select %p254, %s253, 13
        %s256 = smul.u32 8, %s255
        %s257 = smul.u32 13, %s14
        %s258 = ssub.s32 25, %s257
        %p259 = scmp.lt.s32.totalorder %s258, 13
        %s260 = scalar_select %p259, %s258, 13
        %s261 = smul.u32 8, %s260
        %p262 = scmp.lt.s32.totalorder %s257, 24
        %s263 = scalar_select %p262, %s257, 24
        %s264 = smul.addr %s263, 8
        %s265 = scalar_lea.vmem %s2, %s264
        %s266 = smul.u32 13, %s14
        %s267 = ssub.s32 25, %s266
        %p268 = scmp.lt.s32.totalorder %s267, 13
        %s269 = scalar_select %p268, %s267, 13
        %s270 = smul.u32 8, %s269
        %s271 = smul.u32 13, %s14
        %s272 = ssub.s32 25, %s271
        %p273 = scmp.lt.s32.totalorder %s272, 13
        %s274 = scalar_select %p273, %s272, 13
        %s275 = smul.u32 8, %s274
        %v277 = vld [vmem:[%s237] sm:$0xff]
        %v278 = vld [vmem:[%s237 + $0x8] sm:$0xff]
        %v279 = vld [vmem:[%s237 + $0x10] sm:$0xff]
        %v280 = vld [vmem:[%s237 + $0x18] sm:$0xff]
        %v281 = vld [vmem:[%s237 + $0x20] sm:$0xff]
        %v282 = vld [vmem:[%s237 + $0x28] sm:$0xff]
        %v283 = vld [vmem:[%s237 + $0x30] sm:$0xff]
        %v284 = vld [vmem:[%s237 + $0x38] sm:$0xff]
        %v285 = vld [vmem:[%s237 + $0x40] sm:$0xff]
        %v286 = vld [vmem:[%s237 + $0x48] sm:$0xff]
        %v287 = vld [vmem:[%s237 + $0x50] sm:$0xff]
        %v288 = vld [vmem:[%s237 + $0x58] sm:$0xff]
        %v289 = vld [vmem:[%s237 + $0x60] sm:$0xff]
        %v290 = vld [vmem:[%s251] sm:$0xff]
        %v291 = vld [vmem:[%s251 + $0x8] sm:$0xff]
        %v292 = vld [vmem:[%s251 + $0x10] sm:$0xff]
        %v293 = vld [vmem:[%s251 + $0x18] sm:$0xff]
        %v294 = vld [vmem:[%s251 + $0x20] sm:$0xff]
        %v295 = vld [vmem:[%s251 + $0x28] sm:$0xff]
        %v296 = vld [vmem:[%s251 + $0x30] sm:$0xff]
        %v297 = vld [vmem:[%s251 + $0x38] sm:$0xff]
        %v298 = vld [vmem:[%s251 + $0x40] sm:$0xff]
        %v299 = vld [vmem:[%s251 + $0x48] sm:$0xff]
        %v300 = vld [vmem:[%s251 + $0x50] sm:$0xff]
        %v301 = vld [vmem:[%s251 + $0x58] sm:$0xff]
        %v302 = vld [vmem:[%s251 + $0x60] sm:$0xff]
        %v303 = vld [vmem:[%s265] sm:$0xff]
        %v304 = vld [vmem:[%s265 + $0x8] sm:$0xff]
        %v305 = vld [vmem:[%s265 + $0x10] sm:$0xff]
        %v306 = vld [vmem:[%s265 + $0x18] sm:$0xff]
        %v307 = vld [vmem:[%s265 + $0x20] sm:$0xff]
        %v308 = vld [vmem:[%s265 + $0x28] sm:$0xff]
        %v309 = vld [vmem:[%s265 + $0x30] sm:$0xff]
        %v310 = vld [vmem:[%s265 + $0x38] sm:$0xff]
        %v311 = vld [vmem:[%s265 + $0x40] sm:$0xff]
        %v312 = vld [vmem:[%s265 + $0x48] sm:$0xff]
        %v313 = vld [vmem:[%s265 + $0x50] sm:$0xff]
        %v314 = vld [vmem:[%s265 + $0x58] sm:$0xff]
        %v315 = vld [vmem:[%s265 + $0x60] sm:$0xff]
        %v316 = vsub.f32 1.0, %v277
        %v317 = vsub.f32 1.0, %v278
        %v318 = vsub.f32 1.0, %v279
        %v319 = vsub.f32 1.0, %v280
        %v320 = vsub.f32 1.0, %v281
        %v321 = vsub.f32 1.0, %v282
        %v322 = vsub.f32 1.0, %v283
        %v323 = vsub.f32 1.0, %v284
        %v324 = vsub.f32 1.0, %v285
        %v325 = vsub.f32 1.0, %v286
        %v326 = vsub.f32 1.0, %v287
        %v327 = vsub.f32 1.0, %v288
        %v328 = vsub.f32 1.0, %v289
        %v329 = vlaneseq
        %v330 = vand.u32 %v329, 127
        %vm331 = vcmask 1047616
        %332 = vrot.lane.b32.xlu0 %v316, 8
        %v333 = vpop.permute.xlu0 %332
        %v334 = vsel %vm331, %v333, %v316
        %335 = vrot.lane.b32.xlu0 %v317, 8
        %v336 = vpop.permute.xlu0 %335
        %v337 = vsel %vm331, %v336, %v317
        %338 = vrot.lane.b32.xlu0 %v318, 8
        %v339 = vpop.permute.xlu0 %338
        %v340 = vsel %vm331, %v339, %v318
        %341 = vrot.lane.b32.xlu0 %v319, 8
        %v342 = vpop.permute.xlu0 %341
        %v343 = vsel %vm331, %v342, %v319
        %344 = vrot.lane.b32.xlu0 %v320, 8
        %v345 = vpop.permute.xlu0 %344
        %v346 = vsel %vm331, %v345, %v320
        %347 = vrot.lane.b32.xlu0 %v321, 8
        %v348 = vpop.permute.xlu0 %347
        %v349 = vsel %vm331, %v348, %v321
        %350 = vrot.lane.b32.xlu0 %v322, 8
        %v351 = vpop.permute.xlu0 %350
        %v352 = vsel %vm331, %v351, %v322
        %353 = vrot.lane.b32.xlu0 %v323, 8
        %v354 = vpop.permute.xlu0 %353
        %v355 = vsel %vm331, %v354, %v323
        %356 = vrot.lane.b32.xlu0 %v324, 8
        %v357 = vpop.permute.xlu0 %356
        %v358 = vsel %vm331, %v357, %v324
        %359 = vrot.lane.b32.xlu0 %v325, 8
        %v360 = vpop.permute.xlu0 %359
        %v361 = vsel %vm331, %v360, %v325
        %362 = vrot.lane.b32.xlu0 %v326, 8
        %v363 = vpop.permute.xlu0 %362
        %v364 = vsel %vm331, %v363, %v326
        %365 = vrot.lane.b32.xlu0 %v327, 8
        %v366 = vpop.permute.xlu0 %365
        %v367 = vsel %vm331, %v366, %v327
        %368 = vrot.lane.b32.xlu0 %v328, 8
        %v369 = vpop.permute.xlu0 %368
        %v370 = vsel %vm331, %v369, %v328
        %371 = vrot.lane.b32.xlu0 %v334, 8
        %v372 = vpop.permute.xlu0 %371
        %373 = vrot.lane.b32.xlu0 %v337, 8
        %v374 = vpop.permute.xlu0 %373
        %375 = vrot.lane.b32.xlu0 %v340, 8
        %v376 = vpop.permute.xlu0 %375
        %377 = vrot.lane.b32.xlu0 %v343, 8
        %v378 = vpop.permute.xlu0 %377
        %379 = vrot.lane.b32.xlu0 %v346, 8
        %v380 = vpop.permute.xlu0 %379
        %381 = vrot.lane.b32.xlu0 %v349, 8
        %v382 = vpop.permute.xlu0 %381
        %383 = vrot.lane.b32.xlu0 %v352, 8
        %v384 = vpop.permute.xlu0 %383
        %385 = vrot.lane.b32.xlu0 %v355, 8
        %v386 = vpop.permute.xlu0 %385
        %387 = vrot.lane.b32.xlu0 %v358, 8
        %v388 = vpop.permute.xlu0 %387
        %389 = vrot.lane.b32.xlu0 %v361, 8
        %v390 = vpop.permute.xlu0 %389
        %391 = vrot.lane.b32.xlu0 %v364, 8
        %v392 = vpop.permute.xlu0 %391
        %393 = vrot.lane.b32.xlu0 %v367, 8
        %v394 = vpop.permute.xlu0 %393
        %395 = vrot.lane.b32.xlu0 %v370, 8
        %v396 = vpop.permute.xlu0 %395
        %v397 = vsel %vm331, %v372, %v316
        %v398 = vsel %vm331, %v374, %v317
        %v399 = vsel %vm331, %v376, %v318
        %v400 = vsel %vm331, %v378, %v319
        %v401 = vsel %vm331, %v380, %v320
        %v402 = vsel %vm331, %v382, %v321
        %v403 = vsel %vm331, %v384, %v322
        %v404 = vsel %vm331, %v386, %v323
        %v405 = vsel %vm331, %v388, %v324
        %v406 = vsel %vm331, %v390, %v325
        %v407 = vsel %vm331, %v392, %v326
        %v408 = vsel %vm331, %v394, %v327
        %v409 = vsel %vm331, %v396, %v328
        %vm410 = vcmp.ge.s32.totalorder %v330, 1
        %424 = vrot.lane.b32.xlu0 %v397, 121
        %v425 = vpop.permute.xlu0 %424
        %426 = vrot.lane.b32.xlu0 %v398, 121
        %v427 = vpop.permute.xlu0 %426
        %428 = vrot.lane.b32.xlu0 %v399, 121
        %v429 = vpop.permute.xlu0 %428
        %430 = vrot.lane.b32.xlu0 %v400, 121
        %v431 = vpop.permute.xlu0 %430
        %432 = vrot.lane.b32.xlu0 %v401, 121
        %v433 = vpop.permute.xlu0 %432
        %434 = vrot.lane.b32.xlu0 %v402, 121
        %v435 = vpop.permute.xlu0 %434
        %436 = vrot.lane.b32.xlu0 %v403, 121
        %v437 = vpop.permute.xlu0 %436
        %438 = vrot.lane.b32.xlu0 %v404, 121
        %v439 = vpop.permute.xlu0 %438
        %440 = vrot.lane.b32.xlu0 %v405, 121
        %v441 = vpop.permute.xlu0 %440
        %442 = vrot.lane.b32.xlu0 %v406, 121
        %v443 = vpop.permute.xlu0 %442
        %444 = vrot.lane.b32.xlu0 %v407, 121
        %v445 = vpop.permute.xlu0 %444
        %446 = vrot.lane.b32.xlu0 %v408, 121
        %v447 = vpop.permute.xlu0 %446
        %448 = vrot.lane.b32.xlu0 %v409, 121
        %v449 = vpop.permute.xlu0 %448
        %v463 = vmul.f32 %v316, %v425
        %v464 = vmul.f32 %v317, %v427
        %v465 = vmul.f32 %v318, %v429
        %v466 = vmul.f32 %v319, %v431
        %v467 = vmul.f32 %v320, %v433
        %v468 = vmul.f32 %v321, %v435
        %v469 = vmul.f32 %v322, %v437
        %v470 = vmul.f32 %v323, %v439
        %v471 = vmul.f32 %v324, %v441
        %v472 = vmul.f32 %v325, %v443
        %v473 = vmul.f32 %v326, %v445
        %v474 = vmul.f32 %v327, %v447
        %v475 = vmul.f32 %v328, %v449
        %v476 = vsel %vm410, %v463, %v316
        %v477 = vsel %vm410, %v464, %v317
        %v478 = vsel %vm410, %v465, %v318
        %v479 = vsel %vm410, %v466, %v319
        %v480 = vsel %vm410, %v467, %v320
        %v481 = vsel %vm410, %v468, %v321
        %v482 = vsel %vm410, %v469, %v322
        %v483 = vsel %vm410, %v470, %v323
        %v484 = vsel %vm410, %v471, %v324
        %v485 = vsel %vm410, %v472, %v325
        %v486 = vsel %vm410, %v473, %v326
        %v487 = vsel %vm410, %v474, %v327
        %v488 = vsel %vm410, %v475, %v328
        %489 = vrot.lane.b32.xlu0 %v476, 8
        %v490 = vpop.permute.xlu0 %489
        %v491 = vsel %vm331, %v490, %v476
        %492 = vrot.lane.b32.xlu0 %v477, 8
        %v493 = vpop.permute.xlu0 %492
        %v494 = vsel %vm331, %v493, %v477
        %495 = vrot.lane.b32.xlu0 %v478, 8
        %v496 = vpop.permute.xlu0 %495
        %v497 = vsel %vm331, %v496, %v478
        %498 = vrot.lane.b32.xlu0 %v479, 8
        %v499 = vpop.permute.xlu0 %498
        %v500 = vsel %vm331, %v499, %v479
        %501 = vrot.lane.b32.xlu0 %v480, 8
        %v502 = vpop.permute.xlu0 %501
        %v503 = vsel %vm331, %v502, %v480
        %504 = vrot.lane.b32.xlu0 %v481, 8
        %v505 = vpop.permute.xlu0 %504
        %v506 = vsel %vm331, %v505, %v481
        %507 = vrot.lane.b32.xlu0 %v482, 8
        %v508 = vpop.permute.xlu0 %507
        %v509 = vsel %vm331, %v508, %v482
        %510 = vrot.lane.b32.xlu0 %v483, 8
        %v511 = vpop.permute.xlu0 %510
        %v512 = vsel %vm331, %v511, %v483
        %513 = vrot.lane.b32.xlu0 %v484, 8
        %v514 = vpop.permute.xlu0 %513
        %v515 = vsel %vm331, %v514, %v484
        %516 = vrot.lane.b32.xlu0 %v485, 8
        %v517 = vpop.permute.xlu0 %516
        %v518 = vsel %vm331, %v517, %v485
        %519 = vrot.lane.b32.xlu0 %v486, 8
        %v520 = vpop.permute.xlu0 %519
        %v521 = vsel %vm331, %v520, %v486
        %522 = vrot.lane.b32.xlu0 %v487, 8
        %v523 = vpop.permute.xlu0 %522
        %v524 = vsel %vm331, %v523, %v487
        %525 = vrot.lane.b32.xlu0 %v488, 8
        %v526 = vpop.permute.xlu0 %525
        %v527 = vsel %vm331, %v526, %v488
        %528 = vrot.lane.b32.xlu0 %v491, 8
        %v529 = vpop.permute.xlu0 %528
        %530 = vrot.lane.b32.xlu0 %v494, 8
        %v531 = vpop.permute.xlu0 %530
        %532 = vrot.lane.b32.xlu0 %v497, 8
        %v533 = vpop.permute.xlu0 %532
        %534 = vrot.lane.b32.xlu0 %v500, 8
        %v535 = vpop.permute.xlu0 %534
        %536 = vrot.lane.b32.xlu0 %v503, 8
        %v537 = vpop.permute.xlu0 %536
        %538 = vrot.lane.b32.xlu0 %v506, 8
        %v539 = vpop.permute.xlu0 %538
        %540 = vrot.lane.b32.xlu0 %v509, 8
        %v541 = vpop.permute.xlu0 %540
        %542 = vrot.lane.b32.xlu0 %v512, 8
        %v543 = vpop.permute.xlu0 %542
        %544 = vrot.lane.b32.xlu0 %v515, 8
        %v545 = vpop.permute.xlu0 %544
        %546 = vrot.lane.b32.xlu0 %v518, 8
        %v547 = vpop.permute.xlu0 %546
        %548 = vrot.lane.b32.xlu0 %v521, 8
        %v549 = vpop.permute.xlu0 %548
        %550 = vrot.lane.b32.xlu0 %v524, 8
        %v551 = vpop.permute.xlu0 %550
        %552 = vrot.lane.b32.xlu0 %v527, 8
        %v553 = vpop.permute.xlu0 %552
        %v554 = vsel %vm331, %v529, %v476
        %v555 = vsel %vm331, %v531, %v477
        %v556 = vsel %vm331, %v533, %v478
        %v557 = vsel %vm331, %v535, %v479
        %v558 = vsel %vm331, %v537, %v480
        %v559 = vsel %vm331, %v539, %v481
        %v560 = vsel %vm331, %v541, %v482
        %v561 = vsel %vm331, %v543, %v483
        %v562 = vsel %vm331, %v545, %v484
        %v563 = vsel %vm331, %v547, %v485
        %v564 = vsel %vm331, %v549, %v486
        %v565 = vsel %vm331, %v551, %v487
        %v566 = vsel %vm331, %v553, %v488
        %vm567 = vcmp.ge.s32.totalorder %v330, 2
        %581 = vrot.lane.b32.xlu0 %v554, 122
        %v582 = vpop.permute.xlu0 %581
        %583 = vrot.lane.b32.xlu0 %v555, 122
        %v584 = vpop.permute.xlu0 %583
        %585 = vrot.lane.b32.xlu0 %v556, 122
        %v586 = vpop.permute.xlu0 %585
        %587 = vrot.lane.b32.xlu0 %v557, 122
        %v588 = vpop.permute.xlu0 %587
        %589 = vrot.lane.b32.xlu0 %v558, 122
        %v590 = vpop.permute.xlu0 %589
        %591 = vrot.lane.b32.xlu0 %v559, 122
        %v592 = vpop.permute.xlu0 %591
        %593 = vrot.lane.b32.xlu0 %v560, 122
        %v594 = vpop.permute.xlu0 %593
        %595 = vrot.lane.b32.xlu0 %v561, 122
        %v596 = vpop.permute.xlu0 %595
        %597 = vrot.lane.b32.xlu0 %v562, 122
        %v598 = vpop.permute.xlu0 %597
        %599 = vrot.lane.b32.xlu0 %v563, 122
        %v600 = vpop.permute.xlu0 %599
        %601 = vrot.lane.b32.xlu0 %v564, 122
        %v602 = vpop.permute.xlu0 %601
        %603 = vrot.lane.b32.xlu0 %v565, 122
        %v604 = vpop.permute.xlu0 %603
        %605 = vrot.lane.b32.xlu0 %v566, 122
        %v606 = vpop.permute.xlu0 %605
        %v620 = vmul.f32 %v476, %v582
        %v621 = vmul.f32 %v477, %v584
        %v622 = vmul.f32 %v478, %v586
        %v623 = vmul.f32 %v479, %v588
        %v624 = vmul.f32 %v480, %v590
        %v625 = vmul.f32 %v481, %v592
        %v626 = vmul.f32 %v482, %v594
        %v627 = vmul.f32 %v483, %v596
        %v628 = vmul.f32 %v484, %v598
        %v629 = vmul.f32 %v485, %v600
        %v630 = vmul.f32 %v486, %v602
        %v631 = vmul.f32 %v487, %v604
        %v632 = vmul.f32 %v488, %v606
        %v633 = vsel %vm567, %v620, %v476
        %v634 = vsel %vm567, %v621, %v477
        %v635 = vsel %vm567, %v622, %v478
        %v636 = vsel %vm567, %v623, %v479
        %v637 = vsel %vm567, %v624, %v480
        %v638 = vsel %vm567, %v625, %v481
        %v639 = vsel %vm567, %v626, %v482
        %v640 = vsel %vm567, %v627, %v483
        %v641 = vsel %vm567, %v628, %v484
        %v642 = vsel %vm567, %v629, %v485
        %v643 = vsel %vm567, %v630, %v486
        %v644 = vsel %vm567, %v631, %v487
        %v645 = vsel %vm567, %v632, %v488
        %646 = vrot.lane.b32.xlu0 %v633, 8
        %v647 = vpop.permute.xlu0 %646
        %v648 = vsel %vm331, %v647, %v633
        %649 = vrot.lane.b32.xlu0 %v634, 8
        %v650 = vpop.permute.xlu0 %649
        %v651 = vsel %vm331, %v650, %v634
        %652 = vrot.lane.b32.xlu0 %v635, 8
        %v653 = vpop.permute.xlu0 %652
        %v654 = vsel %vm331, %v653, %v635
        %655 = vrot.lane.b32.xlu0 %v636, 8
        %v656 = vpop.permute.xlu0 %655
        %v657 = vsel %vm331, %v656, %v636
        %658 = vrot.lane.b32.xlu0 %v637, 8
        %v659 = vpop.permute.xlu0 %658
        %v660 = vsel %vm331, %v659, %v637
        %661 = vrot.lane.b32.xlu0 %v638, 8
        %v662 = vpop.permute.xlu0 %661
        %v663 = vsel %vm331, %v662, %v638
        %664 = vrot.lane.b32.xlu0 %v639, 8
        %v665 = vpop.permute.xlu0 %664
        %v666 = vsel %vm331, %v665, %v639
        %667 = vrot.lane.b32.xlu0 %v640, 8
        %v668 = vpop.permute.xlu0 %667
        %v669 = vsel %vm331, %v668, %v640
        %670 = vrot.lane.b32.xlu0 %v641, 8
        %v671 = vpop.permute.xlu0 %670
        %v672 = vsel %vm331, %v671, %v641
        %673 = vrot.lane.b32.xlu0 %v642, 8
        %v674 = vpop.permute.xlu0 %673
        %v675 = vsel %vm331, %v674, %v642
        %676 = vrot.lane.b32.xlu0 %v643, 8
        %v677 = vpop.permute.xlu0 %676
        %v678 = vsel %vm331, %v677, %v643
        %679 = vrot.lane.b32.xlu0 %v644, 8
        %v680 = vpop.permute.xlu0 %679
        %v681 = vsel %vm331, %v680, %v644
        %682 = vrot.lane.b32.xlu0 %v645, 8
        %v683 = vpop.permute.xlu0 %682
        %v684 = vsel %vm331, %v683, %v645
        %685 = vrot.lane.b32.xlu0 %v648, 8
        %v686 = vpop.permute.xlu0 %685
        %687 = vrot.lane.b32.xlu0 %v651, 8
        %v688 = vpop.permute.xlu0 %687
        %689 = vrot.lane.b32.xlu0 %v654, 8
        %v690 = vpop.permute.xlu0 %689
        %691 = vrot.lane.b32.xlu0 %v657, 8
        %v692 = vpop.permute.xlu0 %691
        %693 = vrot.lane.b32.xlu0 %v660, 8
        %v694 = vpop.permute.xlu0 %693
        %695 = vrot.lane.b32.xlu0 %v663, 8
        %v696 = vpop.permute.xlu0 %695
        %697 = vrot.lane.b32.xlu0 %v666, 8
        %v698 = vpop.permute.xlu0 %697
        %699 = vrot.lane.b32.xlu0 %v669, 8
        %v700 = vpop.permute.xlu0 %699
        %701 = vrot.lane.b32.xlu0 %v672, 8
        %v702 = vpop.permute.xlu0 %701
        %703 = vrot.lane.b32.xlu0 %v675, 8
        %v704 = vpop.permute.xlu0 %703
        %705 = vrot.lane.b32.xlu0 %v678, 8
        %v706 = vpop.permute.xlu0 %705
        %707 = vrot.lane.b32.xlu0 %v681, 8
        %v708 = vpop.permute.xlu0 %707
        %709 = vrot.lane.b32.xlu0 %v684, 8
        %v710 = vpop.permute.xlu0 %709
        %v711 = vsel %vm331, %v686, %v633
        %v712 = vsel %vm331, %v688, %v634
        %v713 = vsel %vm331, %v690, %v635
        %v714 = vsel %vm331, %v692, %v636
        %v715 = vsel %vm331, %v694, %v637
        %v716 = vsel %vm331, %v696, %v638
        %v717 = vsel %vm331, %v698, %v639
        %v718 = vsel %vm331, %v700, %v640
        %v719 = vsel %vm331, %v702, %v641
        %v720 = vsel %vm331, %v704, %v642
        %v721 = vsel %vm331, %v706, %v643
        %v722 = vsel %vm331, %v708, %v644
        %v723 = vsel %vm331, %v710, %v645
        %vm724 = vcmp.ge.s32.totalorder %v330, 4
        %738 = vrot.lane.b32.xlu0 %v711, 124
        %v739 = vpop.permute.xlu0 %738
        %740 = vrot.lane.b32.xlu0 %v712, 124
        %v741 = vpop.permute.xlu0 %740
        %742 = vrot.lane.b32.xlu0 %v713, 124
        %v743 = vpop.permute.xlu0 %742
        %744 = vrot.lane.b32.xlu0 %v714, 124
        %v745 = vpop.permute.xlu0 %744
        %746 = vrot.lane.b32.xlu0 %v715, 124
        %v747 = vpop.permute.xlu0 %746
        %748 = vrot.lane.b32.xlu0 %v716, 124
        %v749 = vpop.permute.xlu0 %748
        %750 = vrot.lane.b32.xlu0 %v717, 124
        %v751 = vpop.permute.xlu0 %750
        %752 = vrot.lane.b32.xlu0 %v718, 124
        %v753 = vpop.permute.xlu0 %752
        %754 = vrot.lane.b32.xlu0 %v719, 124
        %v755 = vpop.permute.xlu0 %754
        %756 = vrot.lane.b32.xlu0 %v720, 124
        %v757 = vpop.permute.xlu0 %756
        %758 = vrot.lane.b32.xlu0 %v721, 124
        %v759 = vpop.permute.xlu0 %758
        %760 = vrot.lane.b32.xlu0 %v722, 124
        %v761 = vpop.permute.xlu0 %760
        %762 = vrot.lane.b32.xlu0 %v723, 124
        %v763 = vpop.permute.xlu0 %762
        %v777 = vmul.f32 %v633, %v739
        %v778 = vmul.f32 %v634, %v741
        %v779 = vmul.f32 %v635, %v743
        %v780 = vmul.f32 %v636, %v745
        %v781 = vmul.f32 %v637, %v747
        %v782 = vmul.f32 %v638, %v749
        %v783 = vmul.f32 %v639, %v751
        %v784 = vmul.f32 %v640, %v753
        %v785 = vmul.f32 %v641, %v755
        %v786 = vmul.f32 %v642, %v757
        %v787 = vmul.f32 %v643, %v759
        %v788 = vmul.f32 %v644, %v761
        %v789 = vmul.f32 %v645, %v763
        %v790 = vsel %vm724, %v777, %v633
        %v791 = vsel %vm724, %v778, %v634
        %v792 = vsel %vm724, %v779, %v635
        %v793 = vsel %vm724, %v780, %v636
        %v794 = vsel %vm724, %v781, %v637
        %v795 = vsel %vm724, %v782, %v638
        %v796 = vsel %vm724, %v783, %v639
        %v797 = vsel %vm724, %v784, %v640
        %v798 = vsel %vm724, %v785, %v641
        %v799 = vsel %vm724, %v786, %v642
        %v800 = vsel %vm724, %v787, %v643
        %v801 = vsel %vm724, %v788, %v644
        %v802 = vsel %vm724, %v789, %v645
        %803 = vrot.lane.b32.xlu0 %v790, 8
        %v804 = vpop.permute.xlu0 %803
        %v805 = vsel %vm331, %v804, %v790
        %806 = vrot.lane.b32.xlu0 %v791, 8
        %v807 = vpop.permute.xlu0 %806
        %v808 = vsel %vm331, %v807, %v791
        %809 = vrot.lane.b32.xlu0 %v792, 8
        %v810 = vpop.permute.xlu0 %809
        %v811 = vsel %vm331, %v810, %v792
        %812 = vrot.lane.b32.xlu0 %v793, 8
        %v813 = vpop.permute.xlu0 %812
        %v814 = vsel %vm331, %v813, %v793
        %815 = vrot.lane.b32.xlu0 %v794, 8
        %v816 = vpop.permute.xlu0 %815
        %v817 = vsel %vm331, %v816, %v794
        %818 = vrot.lane.b32.xlu0 %v795, 8
        %v819 = vpop.permute.xlu0 %818
        %v820 = vsel %vm331, %v819, %v795
        %821 = vrot.lane.b32.xlu0 %v796, 8
        %v822 = vpop.permute.xlu0 %821
        %v823 = vsel %vm331, %v822, %v796
        %824 = vrot.lane.b32.xlu0 %v797, 8
        %v825 = vpop.permute.xlu0 %824
        %v826 = vsel %vm331, %v825, %v797
        %827 = vrot.lane.b32.xlu0 %v798, 8
        %v828 = vpop.permute.xlu0 %827
        %v829 = vsel %vm331, %v828, %v798
        %830 = vrot.lane.b32.xlu0 %v799, 8
        %v831 = vpop.permute.xlu0 %830
        %v832 = vsel %vm331, %v831, %v799
        %833 = vrot.lane.b32.xlu0 %v800, 8
        %v834 = vpop.permute.xlu0 %833
        %v835 = vsel %vm331, %v834, %v800
        %836 = vrot.lane.b32.xlu0 %v801, 8
        %v837 = vpop.permute.xlu0 %836
        %v838 = vsel %vm331, %v837, %v801
        %839 = vrot.lane.b32.xlu0 %v802, 8
        %v840 = vpop.permute.xlu0 %839
        %v841 = vsel %vm331, %v840, %v802
        %842 = vrot.lane.b32.xlu0 %v805, 8
        %v843 = vpop.permute.xlu0 %842
        %844 = vrot.lane.b32.xlu0 %v808, 8
        %v845 = vpop.permute.xlu0 %844
        %846 = vrot.lane.b32.xlu0 %v811, 8
        %v847 = vpop.permute.xlu0 %846
        %848 = vrot.lane.b32.xlu0 %v814, 8
        %v849 = vpop.permute.xlu0 %848
        %850 = vrot.lane.b32.xlu0 %v817, 8
        %v851 = vpop.permute.xlu0 %850
        %852 = vrot.lane.b32.xlu0 %v820, 8
        %v853 = vpop.permute.xlu0 %852
        %854 = vrot.lane.b32.xlu0 %v823, 8
        %v855 = vpop.permute.xlu0 %854
        %856 = vrot.lane.b32.xlu0 %v826, 8
        %v857 = vpop.permute.xlu0 %856
        %858 = vrot.lane.b32.xlu0 %v829, 8
        %v859 = vpop.permute.xlu0 %858
        %860 = vrot.lane.b32.xlu0 %v832, 8
        %v861 = vpop.permute.xlu0 %860
        %862 = vrot.lane.b32.xlu0 %v835, 8
        %v863 = vpop.permute.xlu0 %862
        %864 = vrot.lane.b32.xlu0 %v838, 8
        %v865 = vpop.permute.xlu0 %864
        %866 = vrot.lane.b32.xlu0 %v841, 8
        %v867 = vpop.permute.xlu0 %866
        %v868 = vsel %vm331, %v843, %v790
        %v869 = vsel %vm331, %v845, %v791
        %v870 = vsel %vm331, %v847, %v792
        %v871 = vsel %vm331, %v849, %v793
        %v872 = vsel %vm331, %v851, %v794
        %v873 = vsel %vm331, %v853, %v795
        %v874 = vsel %vm331, %v855, %v796
        %v875 = vsel %vm331, %v857, %v797
        %v876 = vsel %vm331, %v859, %v798
        %v877 = vsel %vm331, %v861, %v799
        %v878 = vsel %vm331, %v863, %v800
        %v879 = vsel %vm331, %v865, %v801
        %v880 = vsel %vm331, %v867, %v802
        %894 = vrot.lane.b32.xlu0 %v868, 121
        %v895 = vpop.permute.xlu0 %894
        %896 = vrot.lane.b32.xlu0 %v869, 121
        %v897 = vpop.permute.xlu0 %896
        %898 = vrot.lane.b32.xlu0 %v870, 121
        %v899 = vpop.permute.xlu0 %898
        %900 = vrot.lane.b32.xlu0 %v871, 121
        %v901 = vpop.permute.xlu0 %900
        %902 = vrot.lane.b32.xlu0 %v872, 121
        %v903 = vpop.permute.xlu0 %902
        %904 = vrot.lane.b32.xlu0 %v873, 121
        %v905 = vpop.permute.xlu0 %904
        %906 = vrot.lane.b32.xlu0 %v874, 121
        %v907 = vpop.permute.xlu0 %906
        %908 = vrot.lane.b32.xlu0 %v875, 121
        %v909 = vpop.permute.xlu0 %908
        %910 = vrot.lane.b32.xlu0 %v876, 121
        %v911 = vpop.permute.xlu0 %910
        %912 = vrot.lane.b32.xlu0 %v877, 121
        %v913 = vpop.permute.xlu0 %912
        %914 = vrot.lane.b32.xlu0 %v878, 121
        %v915 = vpop.permute.xlu0 %914
        %916 = vrot.lane.b32.xlu0 %v879, 121
        %v917 = vpop.permute.xlu0 %916
        %918 = vrot.lane.b32.xlu0 %v880, 121
        %v919 = vpop.permute.xlu0 %918
        %v933 = vsel %vm410, %v895, 1.0
        %v934 = vsel %vm410, %v897, 1.0
        %v935 = vsel %vm410, %v899, 1.0
        %v936 = vsel %vm410, %v901, 1.0
        %v937 = vsel %vm410, %v903, 1.0
        %v938 = vsel %vm410, %v905, 1.0
        %v939 = vsel %vm410, %v907, 1.0
        %v940 = vsel %vm410, %v909, 1.0
        %v941 = vsel %vm410, %v911, 1.0
        %v942 = vsel %vm410, %v913, 1.0
        %v943 = vsel %vm410, %v915, 1.0
        %v944 = vsel %vm410, %v917, 1.0
        %v945 = vsel %vm410, %v919, 1.0
        %v946 = vmul.f32 %v277, %v933
        %v947 = vmul.f32 %v278, %v934
        %v948 = vmul.f32 %v279, %v935
        %v949 = vmul.f32 %v280, %v936
        %v950 = vmul.f32 %v281, %v937
        %v951 = vmul.f32 %v282, %v938
        %v952 = vmul.f32 %v283, %v939
        %v953 = vmul.f32 %v284, %v940
        %v954 = vmul.f32 %v285, %v941
        %v955 = vmul.f32 %v286, %v942
        %v956 = vmul.f32 %v287, %v943
        %v957 = vmul.f32 %v288, %v944
        %v958 = vmul.f32 %v289, %v945
        %vm959 = vcmask 64512
        %v960 = vsel %vm959, %v946, 0.0
        %961 = vadd.xlane.f32.xlu0 %v960
        %v962 = vpop.xlane.xlu0 %961
        %v963 = vsel %vm959, %v947, 0.0
        %964 = vadd.xlane.f32.xlu0 %v963
        %v965 = vpop.xlane.xlu0 %964
        %v966 = vsel %vm959, %v948, 0.0
        %967 = vadd.xlane.f32.xlu0 %v966
        %v968 = vpop.xlane.xlu0 %967
        %v969 = vsel %vm959, %v949, 0.0
        %970 = vadd.xlane.f32.xlu0 %v969
        %v971 = vpop.xlane.xlu0 %970
        %v972 = vsel %vm959, %v950, 0.0
        %973 = vadd.xlane.f32.xlu0 %v972
        %v974 = vpop.xlane.xlu0 %973
        %v975 = vsel %vm959, %v951, 0.0
        %976 = vadd.xlane.f32.xlu0 %v975
        %v977 = vpop.xlane.xlu0 %976
        %v978 = vsel %vm959, %v952, 0.0
        %979 = vadd.xlane.f32.xlu0 %v978
        %v980 = vpop.xlane.xlu0 %979
        %v981 = vsel %vm959, %v953, 0.0
        %982 = vadd.xlane.f32.xlu0 %v981
        %v983 = vpop.xlane.xlu0 %982
        %v984 = vsel %vm959, %v954, 0.0
        %985 = vadd.xlane.f32.xlu0 %v984
        %v986 = vpop.xlane.xlu0 %985
        %v987 = vsel %vm959, %v955, 0.0
        %988 = vadd.xlane.f32.xlu0 %v987
        %v989 = vpop.xlane.xlu0 %988
        %v990 = vsel %vm959, %v956, 0.0
        %991 = vadd.xlane.f32.xlu0 %v990
        %v992 = vpop.xlane.xlu0 %991
        %v993 = vsel %vm959, %v957, 0.0
        %994 = vadd.xlane.f32.xlu0 %v993
        %v995 = vpop.xlane.xlu0 %994
        %v996 = vsel %vm959, %v958, 0.0
        %997 = vadd.xlane.f32.xlu0 %v996
        %v998 = vpop.xlane.xlu0 %997
        %v999 = vsub.f32 1.0, %v962
        %v1000 = vsub.f32 1.0, %v965
        %v1001 = vsub.f32 1.0, %v968
        %v1002 = vsub.f32 1.0, %v971
        %v1003 = vsub.f32 1.0, %v974
        %v1004 = vsub.f32 1.0, %v977
        %v1005 = vsub.f32 1.0, %v980
        %v1006 = vsub.f32 1.0, %v983
        %v1007 = vsub.f32 1.0, %v986
        %v1008 = vsub.f32 1.0, %v989
        %v1009 = vsub.f32 1.0, %v992
        %v1010 = vsub.f32 1.0, %v995
        %v1011 = vsub.f32 1.0, %v998
        %v1012 = vmul.f32 %v946, %v290
        %v1013 = vmul.f32 %v947, %v291
        %v1014 = vmul.f32 %v948, %v292
        %v1015 = vmul.f32 %v949, %v293
        %v1016 = vmul.f32 %v950, %v294
        %v1017 = vmul.f32 %v951, %v295
        %v1018 = vmul.f32 %v952, %v296
        %v1019 = vmul.f32 %v953, %v297
        %v1020 = vmul.f32 %v954, %v298
        %v1021 = vmul.f32 %v955, %v299
        %v1022 = vmul.f32 %v956, %v300
        %v1023 = vmul.f32 %v957, %v301
        %v1024 = vmul.f32 %v958, %v302
        %v1025 = vsel %vm959, %v1012, 0.0
        %1026 = vadd.xlane.f32.xlu0 %v1025
        %v1027 = vpop.xlane.xlu0 %1026
        %v1028 = vsel %vm959, %v1013, 0.0
        %1029 = vadd.xlane.f32.xlu0 %v1028
        %v1030 = vpop.xlane.xlu0 %1029
        %v1031 = vsel %vm959, %v1014, 0.0
        %1032 = vadd.xlane.f32.xlu0 %v1031
        %v1033 = vpop.xlane.xlu0 %1032
        %v1034 = vsel %vm959, %v1015, 0.0
        %1035 = vadd.xlane.f32.xlu0 %v1034
        %v1036 = vpop.xlane.xlu0 %1035
        %v1037 = vsel %vm959, %v1016, 0.0
        %1038 = vadd.xlane.f32.xlu0 %v1037
        %v1039 = vpop.xlane.xlu0 %1038
        %v1040 = vsel %vm959, %v1017, 0.0
        %1041 = vadd.xlane.f32.xlu0 %v1040
        %v1042 = vpop.xlane.xlu0 %1041
        %v1043 = vsel %vm959, %v1018, 0.0
        %1044 = vadd.xlane.f32.xlu0 %v1043
        %v1045 = vpop.xlane.xlu0 %1044
        %v1046 = vsel %vm959, %v1019, 0.0
        %1047 = vadd.xlane.f32.xlu0 %v1046
        %v1048 = vpop.xlane.xlu0 %1047
        %v1049 = vsel %vm959, %v1020, 0.0
        %1050 = vadd.xlane.f32.xlu0 %v1049
        %v1051 = vpop.xlane.xlu0 %1050
        %v1052 = vsel %vm959, %v1021, 0.0
        %1053 = vadd.xlane.f32.xlu0 %v1052
        %v1054 = vpop.xlane.xlu0 %1053
        %v1055 = vsel %vm959, %v1022, 0.0
        %1056 = vadd.xlane.f32.xlu0 %v1055
        %v1057 = vpop.xlane.xlu0 %1056
        %v1058 = vsel %vm959, %v1023, 0.0
        %1059 = vadd.xlane.f32.xlu0 %v1058
        %v1060 = vpop.xlane.xlu0 %1059
        %v1061 = vsel %vm959, %v1024, 0.0
        %1062 = vadd.xlane.f32.xlu0 %v1061
        %v1063 = vpop.xlane.xlu0 %1062
        %v1064 = vmul.f32 %v999, %v290
        %v1065 = vmul.f32 %v1000, %v291
        %v1066 = vmul.f32 %v1001, %v292
        %v1067 = vmul.f32 %v1002, %v293
        %v1068 = vmul.f32 %v1003, %v294
        %v1069 = vmul.f32 %v1004, %v295
        %v1070 = vmul.f32 %v1005, %v296
        %v1071 = vmul.f32 %v1006, %v297
        %v1072 = vmul.f32 %v1007, %v298
        %v1073 = vmul.f32 %v1008, %v299
        %v1074 = vmul.f32 %v1009, %v300
        %v1075 = vmul.f32 %v1010, %v301
        %v1076 = vmul.f32 %v1011, %v302
        %v1077 = vadd.f32 %v1027, %v1064
        %v1078 = vadd.f32 %v1030, %v1065
        %v1079 = vadd.f32 %v1033, %v1066
        %v1080 = vadd.f32 %v1036, %v1067
        %v1081 = vadd.f32 %v1039, %v1068
        %v1082 = vadd.f32 %v1042, %v1069
        %v1083 = vadd.f32 %v1045, %v1070
        %v1084 = vadd.f32 %v1048, %v1071
        %v1085 = vadd.f32 %v1051, %v1072
        %v1086 = vadd.f32 %v1054, %v1073
        %v1087 = vadd.f32 %v1057, %v1074
        %v1088 = vadd.f32 %v1060, %v1075
        %v1089 = vadd.f32 %v1063, %v1076
        %v1090 = vlaneseq
        %v1091 = vshrl.u32 %v1090, 7
        %v1092 = vmul.u32 %v1091, 4
        %vm1093 = vcmp.ge.s32.totalorder %v330, %v1092
        %v1094 = vadd.s32 %v1092, 4
        %vm1095 = vcmp.lt.s32.totalorder %v330, %v1094
        %vm1096 = vmand %vm1093, %vm1095
        %v1097 = vsel %vm1096, 1.0, 0.0
        %v1098 = vpack.c.bf16 %v1097, %v1097
        %v1099 = vpack.c.bf16 %v946, %v946
        %v1100 = vpack.c.bf16 %v947, %v947
        %v1101 = vpack.c.bf16 %v948, %v948
        %v1102 = vpack.c.bf16 %v949, %v949
        %v1103 = vpack.c.bf16 %v950, %v950
        %v1104 = vpack.c.bf16 %v951, %v951
        %v1105 = vpack.c.bf16 %v952, %v952
        %v1106 = vpack.c.bf16 %v953, %v953
        %v1107 = vpack.c.bf16 %v954, %v954
        %v1108 = vpack.c.bf16 %v955, %v955
        %v1109 = vpack.c.bf16 %v956, %v956
        %v1110 = vpack.c.bf16 %v957, %v957
        %v1111 = vpack.c.bf16 %v958, %v958
        %v1112 = vunpack.c.l.bf16 %v1099
        %v1113 = vunpack.c.l.bf16 %v1100
        %v1114 = vunpack.c.l.bf16 %v1101
        %v1115 = vunpack.c.l.bf16 %v1102
        %v1116 = vunpack.c.l.bf16 %v1103
        %v1117 = vunpack.c.l.bf16 %v1104
        %v1118 = vunpack.c.l.bf16 %v1105
        %v1119 = vunpack.c.l.bf16 %v1106
        %v1120 = vunpack.c.l.bf16 %v1107
        %v1121 = vunpack.c.l.bf16 %v1108
        %v1122 = vunpack.c.l.bf16 %v1109
        %v1123 = vunpack.c.l.bf16 %v1110
        %v1124 = vunpack.c.l.bf16 %v1111
        %v1125 = vsub.f32 %v946, %v1112
        %v1126 = vsub.f32 %v947, %v1113
        %v1127 = vsub.f32 %v948, %v1114
        %v1128 = vsub.f32 %v949, %v1115
        %v1129 = vsub.f32 %v950, %v1116
        %v1130 = vsub.f32 %v951, %v1117
        %v1131 = vsub.f32 %v952, %v1118
        %v1132 = vsub.f32 %v953, %v1119
        %v1133 = vsub.f32 %v954, %v1120
        %v1134 = vsub.f32 %v955, %v1121
        %v1135 = vsub.f32 %v956, %v1122
        %v1136 = vsub.f32 %v957, %v1123
        %v1137 = vsub.f32 %v958, %v1124
        %v1138 = vpack.c.bf16 %v1125, %v1125
        %v1139 = vpack.c.bf16 %v1126, %v1126
        %v1140 = vpack.c.bf16 %v1127, %v1127
        %v1141 = vpack.c.bf16 %v1128, %v1128
        %v1142 = vpack.c.bf16 %v1129, %v1129
        %v1143 = vpack.c.bf16 %v1130, %v1130
        %v1144 = vpack.c.bf16 %v1131, %v1131
        %v1145 = vpack.c.bf16 %v1132, %v1132
        %v1146 = vpack.c.bf16 %v1133, %v1133
        %v1147 = vpack.c.bf16 %v1134, %v1134
        %v1148 = vpack.c.bf16 %v1135, %v1135
        %v1149 = vpack.c.bf16 %v1136, %v1136
        %v1150 = vpack.c.bf16 %v1137, %v1137
        %v1164 = vunpack.c.l.b16 %v1138
        %v1165 = vunpack.c.l.b16 %v1139
        %v1166 = vunpack.c.l.b16 %v1140
        %v1167 = vunpack.c.l.b16 %v1141
        %v1168 = vunpack.c.l.b16 %v1142
        %v1169 = vunpack.c.l.b16 %v1143
        %v1170 = vunpack.c.l.b16 %v1144
        %v1171 = vunpack.c.l.b16 %v1145
        %v1172 = vunpack.c.l.b16 %v1146
        %v1173 = vunpack.c.l.b16 %v1147
        %v1174 = vunpack.c.l.b16 %v1148
        %v1175 = vunpack.c.l.b16 %v1149
        %v1176 = vunpack.c.l.b16 %v1150
        %v1177 = vpack.c.b16 %v1165, %v1164
        %v1178 = vpack.c.b16 %v1167, %v1166
        %v1179 = vpack.c.b16 %v1169, %v1168
        %v1180 = vpack.c.b16 %v1171, %v1170
        %v1181 = vpack.c.b16 %v1173, %v1172
        %v1182 = vpack.c.b16 %v1175, %v1174
        %v1183 = vpack.c.b16 %v1176, %v1176
        %v1185 = vsel %vm959, %v1177, 0
        %v1188 = vsel %vm959, %v1178, 0
        %v1191 = vsel %vm959, %v1179, 0
        %v1194 = vsel %vm959, %v1180, 0
        %v1197 = vsel %vm959, %v1181, 0
        %v1200 = vsel %vm959, %v1182, 0
        %v1203 = vsel %vm959, %v1183, 0
        %vm1205 = vcmask 1043456
        %v1207 = vsel %vm1205, %v1098, 0
        %1209 = vmatpush.bf16.msra.mxu0 0
        %1210 = vmatpush.bf16.msra.mxu0 0
        %1211 = vmatpush.bf16.msra.mxu0 0
        %1212 = vmatpush.bf16.msra.mxu0 0
        %1213 = vmatpush.bf16.msra.mxu0 0
        %1214 = vmatpush.bf16.msra.mxu0 0
        %1215 = vmatpush.bf16.msra.mxu0 0
        %1216 = vmatpush.bf16.msra.mxu0 %v1207
        %1217 = vmatmul.bf16.gmra.mxu0 %v1185
        %v1218 = vpop.f32.mrf.mxu0
        %v1219 = vadd.f32 0.0, %v1218
        %v1220 = vpop.f32.mrf.mxu0
        %v1221 = vadd.f32 0.0, %v1220
        %1222 = vmatmul.bf16.gmra.mxu0 %v1188
        %v1223 = vpop.f32.mrf.mxu0
        %v1224 = vadd.f32 0.0, %v1223
        %v1225 = vpop.f32.mrf.mxu0
        %v1226 = vadd.f32 0.0, %v1225
        %1227 = vmatmul.bf16.gmra.mxu0 %v1191
        %v1228 = vpop.f32.mrf.mxu0
        %v1229 = vadd.f32 0.0, %v1228
        %v1230 = vpop.f32.mrf.mxu0
        %v1231 = vadd.f32 0.0, %v1230
        %1232 = vmatmul.bf16.gmra.mxu0 %v1194
        %v1233 = vpop.f32.mrf.mxu0
        %v1234 = vadd.f32 0.0, %v1233
        %v1235 = vpop.f32.mrf.mxu0
        %v1236 = vadd.f32 0.0, %v1235
        %1237 = vmatmul.bf16.gmra.mxu0 %v1197
        %v1238 = vpop.f32.mrf.mxu0
        %v1239 = vadd.f32 0.0, %v1238
        %v1240 = vpop.f32.mrf.mxu0
        %v1241 = vadd.f32 0.0, %v1240
        %1242 = vmatmul.bf16.gmra.mxu0 %v1200
        %v1243 = vpop.f32.mrf.mxu0
        %v1244 = vadd.f32 0.0, %v1243
        %v1245 = vpop.f32.mrf.mxu0
        %v1246 = vadd.f32 0.0, %v1245
        %1247 = vmatmul.bf16.gmra.mxu0 %v1203
        %v1248 = vpop.f32.mrf.mxu0
        %v1249 = vadd.f32 0.0, %v1248
        %v1250 = vpop.f32.mrf.mxu0
        %1251 = vdwg.mxu0
        %v1265 = vunpack.c.l.b16 %v1099
        %v1266 = vunpack.c.l.b16 %v1100
        %v1267 = vunpack.c.l.b16 %v1101
        %v1268 = vunpack.c.l.b16 %v1102
        %v1269 = vunpack.c.l.b16 %v1103
        %v1270 = vunpack.c.l.b16 %v1104
        %v1271 = vunpack.c.l.b16 %v1105
        %v1272 = vunpack.c.l.b16 %v1106
        %v1273 = vunpack.c.l.b16 %v1107
        %v1274 = vunpack.c.l.b16 %v1108
        %v1275 = vunpack.c.l.b16 %v1109
        %v1276 = vunpack.c.l.b16 %v1110
        %v1277 = vunpack.c.l.b16 %v1111
        %v1278 = vpack.c.b16 %v1266, %v1265
        %v1279 = vpack.c.b16 %v1268, %v1267
        %v1280 = vpack.c.b16 %v1270, %v1269
        %v1281 = vpack.c.b16 %v1272, %v1271
        %v1282 = vpack.c.b16 %v1274, %v1273
        %v1283 = vpack.c.b16 %v1276, %v1275
        %v1284 = vpack.c.b16 %v1277, %v1277
        %v1286 = vsel %vm959, %v1278, 0
        %v1289 = vsel %vm959, %v1279, 0
        %v1292 = vsel %vm959, %v1280, 0
        %v1295 = vsel %vm959, %v1281, 0
        %v1298 = vsel %vm959, %v1282, 0
        %v1301 = vsel %vm959, %v1283, 0
        %v1304 = vsel %vm959, %v1284, 0
        %1306 = vmatpush.bf16.msra.mxu0 0
        %1307 = vmatpush.bf16.msra.mxu0 0
        %1308 = vmatpush.bf16.msra.mxu0 0
        %1309 = vmatpush.bf16.msra.mxu0 0
        %1310 = vmatpush.bf16.msra.mxu0 0
        %1311 = vmatpush.bf16.msra.mxu0 0
        %1312 = vmatpush.bf16.msra.mxu0 0
        %1313 = vmatpush.bf16.msra.mxu0 %v1207
        %1314 = vmatmul.bf16.gmra.mxu0 %v1286
        %v1315 = vpop.f32.mrf.mxu0
        %v1316 = vadd.f32 %v1219, %v1315
        %v1317 = vpop.f32.mrf.mxu0
        %v1318 = vadd.f32 %v1221, %v1317
        %1319 = vmatmul.bf16.gmra.mxu0 %v1289
        %v1320 = vpop.f32.mrf.mxu0
        %v1321 = vadd.f32 %v1224, %v1320
        %v1322 = vpop.f32.mrf.mxu0
        %v1323 = vadd.f32 %v1226, %v1322
        %1324 = vmatmul.bf16.gmra.mxu0 %v1292
        %v1325 = vpop.f32.mrf.mxu0
        %v1326 = vadd.f32 %v1229, %v1325
        %v1327 = vpop.f32.mrf.mxu0
        %v1328 = vadd.f32 %v1231, %v1327
        %1329 = vmatmul.bf16.gmra.mxu0 %v1295
        %v1330 = vpop.f32.mrf.mxu0
        %v1331 = vadd.f32 %v1234, %v1330
        %v1332 = vpop.f32.mrf.mxu0
        %v1333 = vadd.f32 %v1236, %v1332
        %1334 = vmatmul.bf16.gmra.mxu0 %v1298
        %v1335 = vpop.f32.mrf.mxu0
        %v1336 = vadd.f32 %v1239, %v1335
        %v1337 = vpop.f32.mrf.mxu0
        %v1338 = vadd.f32 %v1241, %v1337
        %1339 = vmatmul.bf16.gmra.mxu0 %v1301
        %v1340 = vpop.f32.mrf.mxu0
        %v1341 = vadd.f32 %v1244, %v1340
        %v1342 = vpop.f32.mrf.mxu0
        %v1343 = vadd.f32 %v1246, %v1342
        %1344 = vmatmul.bf16.gmra.mxu0 %v1304
        %v1345 = vpop.f32.mrf.mxu0
        %v1346 = vadd.f32 %v1249, %v1345
        %v1347 = vpop.f32.mrf.mxu0
        %1348 = vdwg.mxu0
        %v1349 = vunpack.c.l.bf16 %v1138
        %v1350 = vunpack.c.l.bf16 %v1139
        %v1351 = vunpack.c.l.bf16 %v1140
        %v1352 = vunpack.c.l.bf16 %v1141
        %v1353 = vunpack.c.l.bf16 %v1142
        %v1354 = vunpack.c.l.bf16 %v1143
        %v1355 = vunpack.c.l.bf16 %v1144
        %v1356 = vunpack.c.l.bf16 %v1145
        %v1357 = vunpack.c.l.bf16 %v1146
        %v1358 = vunpack.c.l.bf16 %v1147
        %v1359 = vunpack.c.l.bf16 %v1148
        %v1360 = vunpack.c.l.bf16 %v1149
        %v1361 = vunpack.c.l.bf16 %v1150
        %v1362 = vsub.f32 %v1125, %v1349
        %v1363 = vsub.f32 %v1126, %v1350
        %v1364 = vsub.f32 %v1127, %v1351
        %v1365 = vsub.f32 %v1128, %v1352
        %v1366 = vsub.f32 %v1129, %v1353
        %v1367 = vsub.f32 %v1130, %v1354
        %v1368 = vsub.f32 %v1131, %v1355
        %v1369 = vsub.f32 %v1132, %v1356
        %v1370 = vsub.f32 %v1133, %v1357
        %v1371 = vsub.f32 %v1134, %v1358
        %v1372 = vsub.f32 %v1135, %v1359
        %v1373 = vsub.f32 %v1136, %v1360
        %v1374 = vsub.f32 %v1137, %v1361
        %v1375 = vpack.c.bf16 %v1363, %v1362
        %v1376 = vpack.c.bf16 %v1365, %v1364
        %v1377 = vpack.c.bf16 %v1367, %v1366
        %v1378 = vpack.c.bf16 %v1369, %v1368
        %v1379 = vpack.c.bf16 %v1371, %v1370
        %v1380 = vpack.c.bf16 %v1373, %v1372
        %v1381 = vpack.c.bf16 %v1374, %v1374
        %v1383 = vsel %vm959, %v1375, 0
        %v1386 = vsel %vm959, %v1376, 0
        %v1389 = vsel %vm959, %v1377, 0
        %v1392 = vsel %vm959, %v1378, 0
        %v1395 = vsel %vm959, %v1379, 0
        %v1398 = vsel %vm959, %v1380, 0
        %v1401 = vsel %vm959, %v1381, 0
        %1403 = vmatpush.bf16.msra.mxu0 0
        %1404 = vmatpush.bf16.msra.mxu0 0
        %1405 = vmatpush.bf16.msra.mxu0 0
        %1406 = vmatpush.bf16.msra.mxu0 0
        %1407 = vmatpush.bf16.msra.mxu0 0
        %1408 = vmatpush.bf16.msra.mxu0 0
        %1409 = vmatpush.bf16.msra.mxu0 0
        %1410 = vmatpush.bf16.msra.mxu0 %v1207
        %1411 = vmatmul.bf16.gmra.mxu0 %v1383
        %v1412 = vpop.f32.mrf.mxu0
        %v1413 = vadd.f32 0.0, %v1412
        %v1414 = vpop.f32.mrf.mxu0
        %v1415 = vadd.f32 0.0, %v1414
        %1416 = vmatmul.bf16.gmra.mxu0 %v1386
        %v1417 = vpop.f32.mrf.mxu0
        %v1418 = vadd.f32 0.0, %v1417
        %v1419 = vpop.f32.mrf.mxu0
        %v1420 = vadd.f32 0.0, %v1419
        %1421 = vmatmul.bf16.gmra.mxu0 %v1389
        %v1422 = vpop.f32.mrf.mxu0
        %v1423 = vadd.f32 0.0, %v1422
        %v1424 = vpop.f32.mrf.mxu0
        %v1425 = vadd.f32 0.0, %v1424
        %1426 = vmatmul.bf16.gmra.mxu0 %v1392
        %v1427 = vpop.f32.mrf.mxu0
        %v1428 = vadd.f32 0.0, %v1427
        %v1429 = vpop.f32.mrf.mxu0
        %v1430 = vadd.f32 0.0, %v1429
        %1431 = vmatmul.bf16.gmra.mxu0 %v1395
        %v1432 = vpop.f32.mrf.mxu0
        %v1433 = vadd.f32 0.0, %v1432
        %v1434 = vpop.f32.mrf.mxu0
        %v1435 = vadd.f32 0.0, %v1434
        %1436 = vmatmul.bf16.gmra.mxu0 %v1398
        %v1437 = vpop.f32.mrf.mxu0
        %v1438 = vadd.f32 0.0, %v1437
        %v1439 = vpop.f32.mrf.mxu0
        %v1440 = vadd.f32 0.0, %v1439
        %1441 = vmatmul.bf16.gmra.mxu0 %v1401
        %v1442 = vpop.f32.mrf.mxu0
        %v1443 = vadd.f32 0.0, %v1442
        %v1444 = vpop.f32.mrf.mxu0
        %1445 = vdwg.mxu0
        %v1446 = vadd.f32 %v1316, %v1413
        %v1447 = vadd.f32 %v1318, %v1415
        %v1448 = vadd.f32 %v1321, %v1418
        %v1449 = vadd.f32 %v1323, %v1420
        %v1450 = vadd.f32 %v1326, %v1423
        %v1451 = vadd.f32 %v1328, %v1425
        %v1452 = vadd.f32 %v1331, %v1428
        %v1453 = vadd.f32 %v1333, %v1430
        %v1454 = vadd.f32 %v1336, %v1433
        %v1455 = vadd.f32 %v1338, %v1435
        %v1456 = vadd.f32 %v1341, %v1438
        %v1457 = vadd.f32 %v1343, %v1440
        %v1458 = vadd.f32 %v1346, %v1443
        %v1459 = vmul.f32 %v1446, %v303
        %v1460 = vmul.f32 %v1447, %v304
        %v1461 = vmul.f32 %v1448, %v305
        %v1462 = vmul.f32 %v1449, %v306
        %v1463 = vmul.f32 %v1450, %v307
        %v1464 = vmul.f32 %v1451, %v308
        %v1465 = vmul.f32 %v1452, %v309
        %v1466 = vmul.f32 %v1453, %v310
        %v1467 = vmul.f32 %v1454, %v311
        %v1468 = vmul.f32 %v1455, %v312
        %v1469 = vmul.f32 %v1456, %v313
        %v1470 = vmul.f32 %v1457, %v314
        %v1471 = vmul.f32 %v1458, %v315
        %vm1472 = vcmask 1047808
        %1473 = vrot.lane.b32.xlu0 %v1459, 32
        %v1474 = vpop.permute.xlu0 %1473
        %v1475 = vsel %vm1472, %v1474, %v1459
        %1476 = vrot.lane.b32.xlu0 %v1460, 32
        %v1477 = vpop.permute.xlu0 %1476
        %v1478 = vsel %vm1472, %v1477, %v1460
        %1479 = vrot.lane.b32.xlu0 %v1461, 32
        %v1480 = vpop.permute.xlu0 %1479
        %v1481 = vsel %vm1472, %v1480, %v1461
        %1482 = vrot.lane.b32.xlu0 %v1462, 32
        %v1483 = vpop.permute.xlu0 %1482
        %v1484 = vsel %vm1472, %v1483, %v1462
        %1485 = vrot.lane.b32.xlu0 %v1463, 32
        %v1486 = vpop.permute.xlu0 %1485
        %v1487 = vsel %vm1472, %v1486, %v1463
        %1488 = vrot.lane.b32.xlu0 %v1464, 32
        %v1489 = vpop.permute.xlu0 %1488
        %v1490 = vsel %vm1472, %v1489, %v1464
        %1491 = vrot.lane.b32.xlu0 %v1465, 32
        %v1492 = vpop.permute.xlu0 %1491
        %v1493 = vsel %vm1472, %v1492, %v1465
        %1494 = vrot.lane.b32.xlu0 %v1466, 32
        %v1495 = vpop.permute.xlu0 %1494
        %v1496 = vsel %vm1472, %v1495, %v1466
        %1497 = vrot.lane.b32.xlu0 %v1467, 32
        %v1498 = vpop.permute.xlu0 %1497
        %v1499 = vsel %vm1472, %v1498, %v1467
        %1500 = vrot.lane.b32.xlu0 %v1468, 32
        %v1501 = vpop.permute.xlu0 %1500
        %v1502 = vsel %vm1472, %v1501, %v1468
        %1503 = vrot.lane.b32.xlu0 %v1469, 32
        %v1504 = vpop.permute.xlu0 %1503
        %v1505 = vsel %vm1472, %v1504, %v1469
        %1506 = vrot.lane.b32.xlu0 %v1470, 32
        %v1507 = vpop.permute.xlu0 %1506
        %v1508 = vsel %vm1472, %v1507, %v1470
        %1509 = vrot.lane.b32.xlu0 %v1471, 32
        %v1510 = vpop.permute.xlu0 %1509
        %v1511 = vsel %vm1472, %v1510, %v1471
        %1512 = vrot.lane.b32.xlu0 %v1475, 32
        %v1513 = vpop.permute.xlu0 %1512
        %1514 = vrot.lane.b32.xlu0 %v1478, 32
        %v1515 = vpop.permute.xlu0 %1514
        %1516 = vrot.lane.b32.xlu0 %v1481, 32
        %v1517 = vpop.permute.xlu0 %1516
        %1518 = vrot.lane.b32.xlu0 %v1484, 32
        %v1519 = vpop.permute.xlu0 %1518
        %1520 = vrot.lane.b32.xlu0 %v1487, 32
        %v1521 = vpop.permute.xlu0 %1520
        %1522 = vrot.lane.b32.xlu0 %v1490, 32
        %v1523 = vpop.permute.xlu0 %1522
        %1524 = vrot.lane.b32.xlu0 %v1493, 32
        %v1525 = vpop.permute.xlu0 %1524
        %1526 = vrot.lane.b32.xlu0 %v1496, 32
        %v1527 = vpop.permute.xlu0 %1526
        %1528 = vrot.lane.b32.xlu0 %v1499, 32
        %v1529 = vpop.permute.xlu0 %1528
        %1530 = vrot.lane.b32.xlu0 %v1502, 32
        %v1531 = vpop.permute.xlu0 %1530
        %1532 = vrot.lane.b32.xlu0 %v1505, 32
        %v1533 = vpop.permute.xlu0 %1532
        %1534 = vrot.lane.b32.xlu0 %v1508, 32
        %v1535 = vpop.permute.xlu0 %1534
        %1536 = vrot.lane.b32.xlu0 %v1511, 32
        %v1537 = vpop.permute.xlu0 %1536
        %v1538 = vsel %vm1472, %v1513, %v1459
        %v1539 = vsel %vm1472, %v1515, %v1460
        %v1540 = vsel %vm1472, %v1517, %v1461
        %v1541 = vsel %vm1472, %v1519, %v1462
        %v1542 = vsel %vm1472, %v1521, %v1463
        %v1543 = vsel %vm1472, %v1523, %v1464
        %v1544 = vsel %vm1472, %v1525, %v1465
        %v1545 = vsel %vm1472, %v1527, %v1466
        %v1546 = vsel %vm1472, %v1529, %v1467
        %v1547 = vsel %vm1472, %v1531, %v1468
        %v1548 = vsel %vm1472, %v1533, %v1469
        %v1549 = vsel %vm1472, %v1535, %v1470
        %v1550 = vsel %vm1472, %v1537, %v1471
        %1564 = vrot.lane.b32.xlu0 %v1538, 124
        %v1565 = vpop.permute.xlu0 %1564
        %1566 = vrot.lane.b32.xlu0 %v1539, 124
        %v1567 = vpop.permute.xlu0 %1566
        %1568 = vrot.lane.b32.xlu0 %v1540, 124
        %v1569 = vpop.permute.xlu0 %1568
        %1570 = vrot.lane.b32.xlu0 %v1541, 124
        %v1571 = vpop.permute.xlu0 %1570
        %1572 = vrot.lane.b32.xlu0 %v1542, 124
        %v1573 = vpop.permute.xlu0 %1572
        %1574 = vrot.lane.b32.xlu0 %v1543, 124
        %v1575 = vpop.permute.xlu0 %1574
        %1576 = vrot.lane.b32.xlu0 %v1544, 124
        %v1577 = vpop.permute.xlu0 %1576
        %1578 = vrot.lane.b32.xlu0 %v1545, 124
        %v1579 = vpop.permute.xlu0 %1578
        %1580 = vrot.lane.b32.xlu0 %v1546, 124
        %v1581 = vpop.permute.xlu0 %1580
        %1582 = vrot.lane.b32.xlu0 %v1547, 124
        %v1583 = vpop.permute.xlu0 %1582
        %1584 = vrot.lane.b32.xlu0 %v1548, 124
        %v1585 = vpop.permute.xlu0 %1584
        %1586 = vrot.lane.b32.xlu0 %v1549, 124
        %v1587 = vpop.permute.xlu0 %1586
        %1588 = vrot.lane.b32.xlu0 %v1550, 124
        %v1589 = vpop.permute.xlu0 %1588
        %v1603 = vadd.f32 %v1459, %v1565
        %v1604 = vadd.f32 %v1460, %v1567
        %v1605 = vadd.f32 %v1461, %v1569
        %v1606 = vadd.f32 %v1462, %v1571
        %v1607 = vadd.f32 %v1463, %v1573
        %v1608 = vadd.f32 %v1464, %v1575
        %v1609 = vadd.f32 %v1465, %v1577
        %v1610 = vadd.f32 %v1466, %v1579
        %v1611 = vadd.f32 %v1467, %v1581
        %v1612 = vadd.f32 %v1468, %v1583
        %v1613 = vadd.f32 %v1469, %v1585
        %v1614 = vadd.f32 %v1470, %v1587
        %v1615 = vadd.f32 %v1471, %v1589
        %1616 = vrot.lane.b32.xlu0 %v1603, 32
        %v1617 = vpop.permute.xlu0 %1616
        %v1618 = vsel %vm1472, %v1617, %v1603
        %1619 = vrot.lane.b32.xlu0 %v1604, 32
        %v1620 = vpop.permute.xlu0 %1619
        %v1621 = vsel %vm1472, %v1620, %v1604
        %1622 = vrot.lane.b32.xlu0 %v1605, 32
        %v1623 = vpop.permute.xlu0 %1622
        %v1624 = vsel %vm1472, %v1623, %v1605
        %1625 = vrot.lane.b32.xlu0 %v1606, 32
        %v1626 = vpop.permute.xlu0 %1625
        %v1627 = vsel %vm1472, %v1626, %v1606
        %1628 = vrot.lane.b32.xlu0 %v1607, 32
        %v1629 = vpop.permute.xlu0 %1628
        %v1630 = vsel %vm1472, %v1629, %v1607
        %1631 = vrot.lane.b32.xlu0 %v1608, 32
        %v1632 = vpop.permute.xlu0 %1631
        %v1633 = vsel %vm1472, %v1632, %v1608
        %1634 = vrot.lane.b32.xlu0 %v1609, 32
        %v1635 = vpop.permute.xlu0 %1634
        %v1636 = vsel %vm1472, %v1635, %v1609
        %1637 = vrot.lane.b32.xlu0 %v1610, 32
        %v1638 = vpop.permute.xlu0 %1637
        %v1639 = vsel %vm1472, %v1638, %v1610
        %1640 = vrot.lane.b32.xlu0 %v1611, 32
        %v1641 = vpop.permute.xlu0 %1640
        %v1642 = vsel %vm1472, %v1641, %v1611
        %1643 = vrot.lane.b32.xlu0 %v1612, 32
        %v1644 = vpop.permute.xlu0 %1643
        %v1645 = vsel %vm1472, %v1644, %v1612
        %1646 = vrot.lane.b32.xlu0 %v1613, 32
        %v1647 = vpop.permute.xlu0 %1646
        %v1648 = vsel %vm1472, %v1647, %v1613
        %1649 = vrot.lane.b32.xlu0 %v1614, 32
        %v1650 = vpop.permute.xlu0 %1649
        %v1651 = vsel %vm1472, %v1650, %v1614
        %1652 = vrot.lane.b32.xlu0 %v1615, 32
        %v1653 = vpop.permute.xlu0 %1652
        %v1654 = vsel %vm1472, %v1653, %v1615
        %1655 = vrot.lane.b32.xlu0 %v1618, 32
        %v1656 = vpop.permute.xlu0 %1655
        %1657 = vrot.lane.b32.xlu0 %v1621, 32
        %v1658 = vpop.permute.xlu0 %1657
        %1659 = vrot.lane.b32.xlu0 %v1624, 32
        %v1660 = vpop.permute.xlu0 %1659
        %1661 = vrot.lane.b32.xlu0 %v1627, 32
        %v1662 = vpop.permute.xlu0 %1661
        %1663 = vrot.lane.b32.xlu0 %v1630, 32
        %v1664 = vpop.permute.xlu0 %1663
        %1665 = vrot.lane.b32.xlu0 %v1633, 32
        %v1666 = vpop.permute.xlu0 %1665
        %1667 = vrot.lane.b32.xlu0 %v1636, 32
        %v1668 = vpop.permute.xlu0 %1667
        %1669 = vrot.lane.b32.xlu0 %v1639, 32
        %v1670 = vpop.permute.xlu0 %1669
        %1671 = vrot.lane.b32.xlu0 %v1642, 32
        %v1672 = vpop.permute.xlu0 %1671
        %1673 = vrot.lane.b32.xlu0 %v1645, 32
        %v1674 = vpop.permute.xlu0 %1673
        %1675 = vrot.lane.b32.xlu0 %v1648, 32
        %v1676 = vpop.permute.xlu0 %1675
        %1677 = vrot.lane.b32.xlu0 %v1651, 32
        %v1678 = vpop.permute.xlu0 %1677
        %1679 = vrot.lane.b32.xlu0 %v1654, 32
        %v1680 = vpop.permute.xlu0 %1679
        %v1681 = vsel %vm1472, %v1656, %v1603
        %v1682 = vsel %vm1472, %v1658, %v1604
        %v1683 = vsel %vm1472, %v1660, %v1605
        %v1684 = vsel %vm1472, %v1662, %v1606
        %v1685 = vsel %vm1472, %v1664, %v1607
        %v1686 = vsel %vm1472, %v1666, %v1608
        %v1687 = vsel %vm1472, %v1668, %v1609
        %v1688 = vsel %vm1472, %v1670, %v1610
        %v1689 = vsel %vm1472, %v1672, %v1611
        %v1690 = vsel %vm1472, %v1674, %v1612
        %v1691 = vsel %vm1472, %v1676, %v1613
        %v1692 = vsel %vm1472, %v1678, %v1614
        %v1693 = vsel %vm1472, %v1680, %v1615
        %1707 = vrot.lane.b32.xlu0 %v1681, 120
        %v1708 = vpop.permute.xlu0 %1707
        %1709 = vrot.lane.b32.xlu0 %v1682, 120
        %v1710 = vpop.permute.xlu0 %1709
        %1711 = vrot.lane.b32.xlu0 %v1683, 120
        %v1712 = vpop.permute.xlu0 %1711
        %1713 = vrot.lane.b32.xlu0 %v1684, 120
        %v1714 = vpop.permute.xlu0 %1713
        %1715 = vrot.lane.b32.xlu0 %v1685, 120
        %v1716 = vpop.permute.xlu0 %1715
        %1717 = vrot.lane.b32.xlu0 %v1686, 120
        %v1718 = vpop.permute.xlu0 %1717
        %1719 = vrot.lane.b32.xlu0 %v1687, 120
        %v1720 = vpop.permute.xlu0 %1719
        %1721 = vrot.lane.b32.xlu0 %v1688, 120
        %v1722 = vpop.permute.xlu0 %1721
        %1723 = vrot.lane.b32.xlu0 %v1689, 120
        %v1724 = vpop.permute.xlu0 %1723
        %1725 = vrot.lane.b32.xlu0 %v1690, 120
        %v1726 = vpop.permute.xlu0 %1725
        %1727 = vrot.lane.b32.xlu0 %v1691, 120
        %v1728 = vpop.permute.xlu0 %1727
        %1729 = vrot.lane.b32.xlu0 %v1692, 120
        %v1730 = vpop.permute.xlu0 %1729
        %1731 = vrot.lane.b32.xlu0 %v1693, 120
        %v1732 = vpop.permute.xlu0 %1731
        %v1746 = vadd.f32 %v1603, %v1708
        %v1747 = vadd.f32 %v1604, %v1710
        %v1748 = vadd.f32 %v1605, %v1712
        %v1749 = vadd.f32 %v1606, %v1714
        %v1750 = vadd.f32 %v1607, %v1716
        %v1751 = vadd.f32 %v1608, %v1718
        %v1752 = vadd.f32 %v1609, %v1720
        %v1753 = vadd.f32 %v1610, %v1722
        %v1754 = vadd.f32 %v1611, %v1724
        %v1755 = vadd.f32 %v1612, %v1726
        %v1756 = vadd.f32 %v1613, %v1728
        %v1757 = vadd.f32 %v1614, %v1730
        %v1758 = vadd.f32 %v1615, %v1732
        %1759 = vrot.lane.b32.xlu0 %v1746, 32
        %v1760 = vpop.permute.xlu0 %1759
        %v1761 = vsel %vm1472, %v1760, %v1746
        %1762 = vrot.lane.b32.xlu0 %v1747, 32
        %v1763 = vpop.permute.xlu0 %1762
        %v1764 = vsel %vm1472, %v1763, %v1747
        %1765 = vrot.lane.b32.xlu0 %v1748, 32
        %v1766 = vpop.permute.xlu0 %1765
        %v1767 = vsel %vm1472, %v1766, %v1748
        %1768 = vrot.lane.b32.xlu0 %v1749, 32
        %v1769 = vpop.permute.xlu0 %1768
        %v1770 = vsel %vm1472, %v1769, %v1749
        %1771 = vrot.lane.b32.xlu0 %v1750, 32
        %v1772 = vpop.permute.xlu0 %1771
        %v1773 = vsel %vm1472, %v1772, %v1750
        %1774 = vrot.lane.b32.xlu0 %v1751, 32
        %v1775 = vpop.permute.xlu0 %1774
        %v1776 = vsel %vm1472, %v1775, %v1751
        %1777 = vrot.lane.b32.xlu0 %v1752, 32
        %v1778 = vpop.permute.xlu0 %1777
        %v1779 = vsel %vm1472, %v1778, %v1752
        %1780 = vrot.lane.b32.xlu0 %v1753, 32
        %v1781 = vpop.permute.xlu0 %1780
        %v1782 = vsel %vm1472, %v1781, %v1753
        %1783 = vrot.lane.b32.xlu0 %v1754, 32
        %v1784 = vpop.permute.xlu0 %1783
        %v1785 = vsel %vm1472, %v1784, %v1754
        %1786 = vrot.lane.b32.xlu0 %v1755, 32
        %v1787 = vpop.permute.xlu0 %1786
        %v1788 = vsel %vm1472, %v1787, %v1755
        %1789 = vrot.lane.b32.xlu0 %v1756, 32
        %v1790 = vpop.permute.xlu0 %1789
        %v1791 = vsel %vm1472, %v1790, %v1756
        %1792 = vrot.lane.b32.xlu0 %v1757, 32
        %v1793 = vpop.permute.xlu0 %1792
        %v1794 = vsel %vm1472, %v1793, %v1757
        %1795 = vrot.lane.b32.xlu0 %v1758, 32
        %v1796 = vpop.permute.xlu0 %1795
        %v1797 = vsel %vm1472, %v1796, %v1758
        %1798 = vrot.lane.b32.xlu0 %v1761, 32
        %v1799 = vpop.permute.xlu0 %1798
        %1800 = vrot.lane.b32.xlu0 %v1764, 32
        %v1801 = vpop.permute.xlu0 %1800
        %1802 = vrot.lane.b32.xlu0 %v1767, 32
        %v1803 = vpop.permute.xlu0 %1802
        %1804 = vrot.lane.b32.xlu0 %v1770, 32
        %v1805 = vpop.permute.xlu0 %1804
        %1806 = vrot.lane.b32.xlu0 %v1773, 32
        %v1807 = vpop.permute.xlu0 %1806
        %1808 = vrot.lane.b32.xlu0 %v1776, 32
        %v1809 = vpop.permute.xlu0 %1808
        %1810 = vrot.lane.b32.xlu0 %v1779, 32
        %v1811 = vpop.permute.xlu0 %1810
        %1812 = vrot.lane.b32.xlu0 %v1782, 32
        %v1813 = vpop.permute.xlu0 %1812
        %1814 = vrot.lane.b32.xlu0 %v1785, 32
        %v1815 = vpop.permute.xlu0 %1814
        %1816 = vrot.lane.b32.xlu0 %v1788, 32
        %v1817 = vpop.permute.xlu0 %1816
        %1818 = vrot.lane.b32.xlu0 %v1791, 32
        %v1819 = vpop.permute.xlu0 %1818
        %1820 = vrot.lane.b32.xlu0 %v1794, 32
        %v1821 = vpop.permute.xlu0 %1820
        %1822 = vrot.lane.b32.xlu0 %v1797, 32
        %v1823 = vpop.permute.xlu0 %1822
        %v1824 = vsel %vm1472, %v1799, %v1746
        %v1825 = vsel %vm1472, %v1801, %v1747
        %v1826 = vsel %vm1472, %v1803, %v1748
        %v1827 = vsel %vm1472, %v1805, %v1749
        %v1828 = vsel %vm1472, %v1807, %v1750
        %v1829 = vsel %vm1472, %v1809, %v1751
        %v1830 = vsel %vm1472, %v1811, %v1752
        %v1831 = vsel %vm1472, %v1813, %v1753
        %v1832 = vsel %vm1472, %v1815, %v1754
        %v1833 = vsel %vm1472, %v1817, %v1755
        %v1834 = vsel %vm1472, %v1819, %v1756
        %v1835 = vsel %vm1472, %v1821, %v1757
        %v1836 = vsel %vm1472, %v1823, %v1758
        %1850 = vrot.lane.b32.xlu0 %v1824, 112
        %v1851 = vpop.permute.xlu0 %1850
        %1852 = vrot.lane.b32.xlu0 %v1825, 112
        %v1853 = vpop.permute.xlu0 %1852
        %1854 = vrot.lane.b32.xlu0 %v1826, 112
        %v1855 = vpop.permute.xlu0 %1854
        %1856 = vrot.lane.b32.xlu0 %v1827, 112
        %v1857 = vpop.permute.xlu0 %1856
        %1858 = vrot.lane.b32.xlu0 %v1828, 112
        %v1859 = vpop.permute.xlu0 %1858
        %1860 = vrot.lane.b32.xlu0 %v1829, 112
        %v1861 = vpop.permute.xlu0 %1860
        %1862 = vrot.lane.b32.xlu0 %v1830, 112
        %v1863 = vpop.permute.xlu0 %1862
        %1864 = vrot.lane.b32.xlu0 %v1831, 112
        %v1865 = vpop.permute.xlu0 %1864
        %1866 = vrot.lane.b32.xlu0 %v1832, 112
        %v1867 = vpop.permute.xlu0 %1866
        %1868 = vrot.lane.b32.xlu0 %v1833, 112
        %v1869 = vpop.permute.xlu0 %1868
        %1870 = vrot.lane.b32.xlu0 %v1834, 112
        %v1871 = vpop.permute.xlu0 %1870
        %1872 = vrot.lane.b32.xlu0 %v1835, 112
        %v1873 = vpop.permute.xlu0 %1872
        %1874 = vrot.lane.b32.xlu0 %v1836, 112
        %v1875 = vpop.permute.xlu0 %1874
        %v1889 = vadd.f32 %v1746, %v1851
        %v1890 = vadd.f32 %v1747, %v1853
        %v1891 = vadd.f32 %v1748, %v1855
        %v1892 = vadd.f32 %v1749, %v1857
        %v1893 = vadd.f32 %v1750, %v1859
        %v1894 = vadd.f32 %v1751, %v1861
        %v1895 = vadd.f32 %v1752, %v1863
        %v1896 = vadd.f32 %v1753, %v1865
        %v1897 = vadd.f32 %v1754, %v1867
        %v1898 = vadd.f32 %v1755, %v1869
        %v1899 = vadd.f32 %v1756, %v1871
        %v1900 = vadd.f32 %v1757, %v1873
        %v1901 = vadd.f32 %v1758, %v1875
        %v1902 = vadd.f32 %v1889, %v999
        %v1903 = vadd.f32 %v1890, %v1000
        %v1904 = vadd.f32 %v1891, %v1001
        %v1905 = vadd.f32 %v1892, %v1002
        %v1906 = vadd.f32 %v1893, %v1003
        %v1907 = vadd.f32 %v1894, %v1004
        %v1908 = vadd.f32 %v1895, %v1005
        %v1909 = vadd.f32 %v1896, %v1006
        %v1910 = vadd.f32 %v1897, %v1007
        %v1911 = vadd.f32 %v1898, %v1008
        %v1912 = vadd.f32 %v1899, %v1009
        %v1913 = vadd.f32 %v1900, %v1010
        %v1914 = vadd.f32 %v1901, %v1011
        %vm1915 = vcmask 31744
        %1916 = vst.msk [vmem:[%s228] sm:$0xff] %vm1915, %v1902
        %1917 = vst.msk [vmem:[%s228 + $0x8] sm:$0xff] %vm1915, %v1903
        %1918 = vst.msk [vmem:[%s228 + $0x10] sm:$0xff] %vm1915, %v1904
        %1919 = vst.msk [vmem:[%s228 + $0x18] sm:$0xff] %vm1915, %v1905
        %1920 = vst.msk [vmem:[%s228 + $0x20] sm:$0xff] %vm1915, %v1906
        %1921 = vst.msk [vmem:[%s228 + $0x28] sm:$0xff] %vm1915, %v1907
        %1922 = vst.msk [vmem:[%s228 + $0x30] sm:$0xff] %vm1915, %v1908
        %1923 = vst.msk [vmem:[%s228 + $0x38] sm:$0xff] %vm1915, %v1909
        %1924 = vst.msk [vmem:[%s228 + $0x40] sm:$0xff] %vm1915, %v1910
        %1925 = vst.msk [vmem:[%s228 + $0x48] sm:$0xff] %vm1915, %v1911
        %1926 = vst.msk [vmem:[%s228 + $0x50] sm:$0xff] %vm1915, %v1912
        %1927 = vst.msk [vmem:[%s228 + $0x58] sm:$0xff] %vm1915, %v1913
        %1928 = vst.msk [vmem:[%s228 + $0x60] sm:$0xff] %vm1915, %v1914
        %1942 = vrot.lane.b32.xlu0 %v1077, 125
        %v1943 = vpop.permute.xlu0 %1942
        %1944 = vrot.lane.b32.xlu0 %v1078, 125
        %v1945 = vpop.permute.xlu0 %1944
        %1946 = vrot.lane.b32.xlu0 %v1079, 125
        %v1947 = vpop.permute.xlu0 %1946
        %1948 = vrot.lane.b32.xlu0 %v1080, 125
        %v1949 = vpop.permute.xlu0 %1948
        %1950 = vrot.lane.b32.xlu0 %v1081, 125
        %v1951 = vpop.permute.xlu0 %1950
        %1952 = vrot.lane.b32.xlu0 %v1082, 125
        %v1953 = vpop.permute.xlu0 %1952
        %1954 = vrot.lane.b32.xlu0 %v1083, 125
        %v1955 = vpop.permute.xlu0 %1954
        %1956 = vrot.lane.b32.xlu0 %v1084, 125
        %v1957 = vpop.permute.xlu0 %1956
        %1958 = vrot.lane.b32.xlu0 %v1085, 125
        %v1959 = vpop.permute.xlu0 %1958
        %1960 = vrot.lane.b32.xlu0 %v1086, 125
        %v1961 = vpop.permute.xlu0 %1960
        %1962 = vrot.lane.b32.xlu0 %v1087, 125
        %v1963 = vpop.permute.xlu0 %1962
        %1964 = vrot.lane.b32.xlu0 %v1088, 125
        %v1965 = vpop.permute.xlu0 %1964
        %1966 = vrot.lane.b32.xlu0 %v1089, 125
        %v1967 = vpop.permute.xlu0 %1966
        %vm1981 = vcmask 39968
        %1982 = vst.msk [vmem:[%s228] sm:$0xff] %vm1981, %v1943
        %1983 = vst.msk [vmem:[%s228 + $0x8] sm:$0xff] %vm1981, %v1945
        %1984 = vst.msk [vmem:[%s228 + $0x10] sm:$0xff] %vm1981, %v1947
        %1985 = vst.msk [vmem:[%s228 + $0x18] sm:$0xff] %vm1981, %v1949
        %1986 = vst.msk [vmem:[%s228 + $0x20] sm:$0xff] %vm1981, %v1951
        %1987 = vst.msk [vmem:[%s228 + $0x28] sm:$0xff] %vm1981, %v1953
        %1988 = vst.msk [vmem:[%s228 + $0x30] sm:$0xff] %vm1981, %v1955
        %1989 = vst.msk [vmem:[%s228 + $0x38] sm:$0xff] %vm1981, %v1957
        %1990 = vst.msk [vmem:[%s228 + $0x40] sm:$0xff] %vm1981, %v1959
        %1991 = vst.msk [vmem:[%s228 + $0x48] sm:$0xff] %vm1981, %v1961
        %1992 = vst.msk [vmem:[%s228 + $0x50] sm:$0xff] %vm1981, %v1963
        %1993 = vst.msk [vmem:[%s228 + $0x58] sm:$0xff] %vm1981, %v1965
        %1994 = vst.msk [vmem:[%s228 + $0x60] sm:$0xff] %vm1981, %v1967
        %s1995 = sand.u32 %s100, 1
        %s1996 = sand.u32 %s100, 1
        %s1997 = smul.addr %s1996, 104
        %s1998 = scalar_lea.vmem [#allocation2], %s1997
        // Predicated region
        $region33: #{tpu_custom_call.1} parent=31 // pred_check
          %p1999 = pneg %p110
        $region34: #{tpu_custom_call.1} parent=31 // pred_check_branch
          %2001 = sbr.rel (%p1999) target = $region36
        $region35: #{tpu_custom_call.1} parent=31 // pred_region
          %s2002 = smul.u32 13, %s14
          %s2003 = ssub.s32 25, %s2002
          %p2004 = scmp.lt.s32.totalorder %s2003, 13
          %s2005 = scalar_select %p2004, %s2003, 13
          %s2006 = smul.u32 8, %s2005
          %p2007 = scmp.ne.s32.totalorder 0, %s2006
          %s2008 = smul.addr %s2002, 8
          %s2009 = scalar_lea.vmem %s3, %s2008
          // Predicated region
          $region37: #{tpu_custom_call.1} parent=35 // pred_check
            %p2010 = pneg %p2007
          $region38: #{tpu_custom_call.1} parent=35 // pred_check_branch
            %2012 = sbr.rel (%p2010) target = $region40
          $region39: #{tpu_custom_call.1} parent=35 // pred_region
            // Predicated region
            $region41: #{tpu_custom_call.1} parent=39 // pred_check
              _
            $region42: #{tpu_custom_call.1} parent=39 // pred_check_branch
              %2014 = sbr.rel (0) target = $region44
            $region43: #{tpu_custom_call.1} parent=39 // pred_region
              // Predicated region
              $region63: #{tpu_custom_call.1} parent=43 // pred_check
                _
              $region64: #{tpu_custom_call.1} parent=43 // pred_check_branch
                %2089 = sbr.rel (0) target = $region66
              $region65: #{tpu_custom_call.1} parent=43 // pred_region
                %s2090 = sdiv.u32.pop %s2005, 13
                %s2091 = srem.u32.pop %s2005, 13
                // While loop
                $region67: #{tpu_custom_call.1} parent=65 // loop_pre_header
                  _
                $region68: #{tpu_custom_call.1} parent=65 // loop_header
                  %s2093 = sphi 0, %s2095
                  %p2094 = scmp.ge.s32.totalorder %s2093, %s2090
                  %s2098 = sphi 0, %s2129
                  %s2099 = sphi %s1998, %s2132
                  %s2100 = sphi %s2009, %s2133
                $region69: #{tpu_custom_call.1} parent=65 // loop_header_branch
                  %2097 = sbr.rel (%p2094) target = $region73
                $region70: #{tpu_custom_call.1} parent=65 // loop_body
                  %v2101 = vld [vmem:[%s2099] sm:$0xff]
                  %2102 = vst [vmem:[%s2100] sm:$0xff] %v2101
                  %v2103 = vld [vmem:[%s2099 + $0x8] sm:$0xff]
                  %2104 = vst [vmem:[%s2100 + $0x8] sm:$0xff] %v2103
                  %v2105 = vld [vmem:[%s2099 + $0x10] sm:$0xff]
                  %2106 = vst [vmem:[%s2100 + $0x10] sm:$0xff] %v2105
                  %v2107 = vld [vmem:[%s2099 + $0x18] sm:$0xff]
                  %2108 = vst [vmem:[%s2100 + $0x18] sm:$0xff] %v2107
                  %v2109 = vld [vmem:[%s2099 + $0x20] sm:$0xff]
                  %2110 = vst [vmem:[%s2100 + $0x20] sm:$0xff] %v2109
                  %v2111 = vld [vmem:[%s2099 + $0x28] sm:$0xff]
                  %2112 = vst [vmem:[%s2100 + $0x28] sm:$0xff] %v2111
                  %v2113 = vld [vmem:[%s2099 + $0x30] sm:$0xff]
                  %2114 = vst [vmem:[%s2100 + $0x30] sm:$0xff] %v2113
                  %v2115 = vld [vmem:[%s2099 + $0x38] sm:$0xff]
                  %2116 = vst [vmem:[%s2100 + $0x38] sm:$0xff] %v2115
                  %v2117 = vld [vmem:[%s2099 + $0x40] sm:$0xff]
                  %2118 = vst [vmem:[%s2100 + $0x40] sm:$0xff] %v2117
                  %v2119 = vld [vmem:[%s2099 + $0x48] sm:$0xff]
                  %2120 = vst [vmem:[%s2100 + $0x48] sm:$0xff] %v2119
                  %v2121 = vld [vmem:[%s2099 + $0x50] sm:$0xff]
                  %2122 = vst [vmem:[%s2100 + $0x50] sm:$0xff] %v2121
                  %v2123 = vld [vmem:[%s2099 + $0x58] sm:$0xff]
                  %2124 = vst [vmem:[%s2100 + $0x58] sm:$0xff] %v2123
                  %v2125 = vld [vmem:[%s2099 + $0x60] sm:$0xff]
                  %2126 = vst [vmem:[%s2100 + $0x60] sm:$0xff] %v2125
                  %s2127 = sadd.s32 1, %s2098
                  %p2128 = scmp.ge.s32.totalorder %s2127, %s2090
                  %s2129 = scalar_select %p2128, 0, %s2127
                  %s2130 = smul.u32 %s2129, 104
                  %s2131 = smul.u32 %s2129, 104
                  %s2132 = scalar_lea.vmem %s1998, %s2130 [#allocation2]
                  %s2133 = scalar_lea.vmem %s2009, %s2131
                $region71: #{tpu_custom_call.1} parent=65 // loop_footer
                  %s2095 = sadd.s32 %s2093, 1
                $region72: #{tpu_custom_call.1} parent=65 // loop_footer_branch
                  %2092 = sbr.rel target = $region68
                $region73: #{tpu_custom_call.1} parent=65 // loop_exit
                  _
                %s2134 = sdiv.u32.pop %s2005, 13
                %s2135 = srem.u32.pop %s2005, 13
                %s2136 = smul.u32 %s2134, 13
                %s2137 = smul.u32 8, %s2136
                %s2138 = scalar_lea.vmem %s1998, %s2137 [#allocation2]
                %s2139 = smul.u32 8, %s2136
                %s2140 = scalar_lea.vmem %s2009, %s2139
                // While loop
                $region74: #{tpu_custom_call.1} parent=65 // loop_pre_header
                  _
                $region75: #{tpu_custom_call.1} parent=65 // loop_header
                  %s2142 = sphi 0, %s2144
                  %p2143 = scmp.ge.s32.totalorder %s2142, %s2135
                  %s2147 = sphi 0, %s2154
                  %s2148 = sphi %s2138, %s2157
                  %s2149 = sphi %s2140, %s2158
                $region76: #{tpu_custom_call.1} parent=65 // loop_header_branch
                  %2146 = sbr.rel (%p2143) target = $region80
                $region77: #{tpu_custom_call.1} parent=65 // loop_body
                  %v2150 = vld [vmem:[%s2148] sm:$0xff]
                  %2151 = vst [vmem:[%s2149] sm:$0xff] %v2150
                  %s2152 = sadd.s32 1, %s2147
                  %p2153 = scmp.ge.s32.totalorder %s2152, %s2135
                  %s2154 = scalar_select %p2153, 0, %s2152
                  %s2155 = smul.u32 %s2154, 8
                  %s2156 = smul.u32 %s2154, 8
                  %s2157 = scalar_lea.vmem %s2138, %s2155 [#allocation2]
                  %s2158 = scalar_lea.vmem %s2140, %s2156
                $region78: #{tpu_custom_call.1} parent=65 // loop_footer
                  %s2144 = sadd.s32 %s2142, 1
                $region79: #{tpu_custom_call.1} parent=65 // loop_footer_branch
                  %2141 = sbr.rel target = $region75
                $region80: #{tpu_custom_call.1} parent=65 // loop_exit
                  _
              $region66: #{tpu_custom_call.1} parent=43 // pred_fallthru
                _
              // Predicated region
              $region81: #{tpu_custom_call.1} parent=43 // pred_check
                _
              $region82: #{tpu_custom_call.1} parent=43 // pred_check_branch
                %2160 = sbr.rel target = $region84
              $region83: #{tpu_custom_call.1} parent=43 // pred_region
                _
              $region84: #{tpu_custom_call.1} parent=43 // pred_fallthru
                _
            $region44: #{tpu_custom_call.1} parent=39 // pred_fallthru
              _
            // Predicated region
            $region45: #{tpu_custom_call.1} parent=39 // pred_check
              _
            $region46: #{tpu_custom_call.1} parent=39 // pred_check_branch
              %2016 = sbr.rel target = $region48
            $region47: #{tpu_custom_call.1} parent=39 // pred_region
              %s2018 = ssub.s32 256, 1
              %s2019 = sdiv.u32.pop %s2005, 13
              %s2020 = srem.u32.pop %s2005, 13
              // While loop
              $region49: #{tpu_custom_call.1} parent=47 // loop_pre_header
                _
              $region50: #{tpu_custom_call.1} parent=47 // loop_header
                %s2022 = sphi 0, %s2024
                %p2023 = scmp.ge.s32.totalorder %s2022, %s2019
                %s2027 = sphi 0, %s2058
                %s2028 = sphi %s1998, %s2061
                %s2029 = sphi %s2009, %s2062
              $region51: #{tpu_custom_call.1} parent=47 // loop_header_branch
                %2026 = sbr.rel (%p2023) target = $region55
              $region52: #{tpu_custom_call.1} parent=47 // loop_body
                %v2030 = vld [vmem:[%s2028] sm:%s2018]
                %2031 = vst [vmem:[%s2029] sm:%s2018] %v2030
                %v2032 = vld [vmem:[%s2028 + $0x8] sm:%s2018]
                %2033 = vst [vmem:[%s2029 + $0x8] sm:%s2018] %v2032
                %v2034 = vld [vmem:[%s2028 + $0x10] sm:%s2018]
                %2035 = vst [vmem:[%s2029 + $0x10] sm:%s2018] %v2034
                %v2036 = vld [vmem:[%s2028 + $0x18] sm:%s2018]
                %2037 = vst [vmem:[%s2029 + $0x18] sm:%s2018] %v2036
                %v2038 = vld [vmem:[%s2028 + $0x20] sm:%s2018]
                %2039 = vst [vmem:[%s2029 + $0x20] sm:%s2018] %v2038
                %v2040 = vld [vmem:[%s2028 + $0x28] sm:%s2018]
                %2041 = vst [vmem:[%s2029 + $0x28] sm:%s2018] %v2040
                %v2042 = vld [vmem:[%s2028 + $0x30] sm:%s2018]
                %2043 = vst [vmem:[%s2029 + $0x30] sm:%s2018] %v2042
                %v2044 = vld [vmem:[%s2028 + $0x38] sm:%s2018]
                %2045 = vst [vmem:[%s2029 + $0x38] sm:%s2018] %v2044
                %v2046 = vld [vmem:[%s2028 + $0x40] sm:%s2018]
                %2047 = vst [vmem:[%s2029 + $0x40] sm:%s2018] %v2046
                %v2048 = vld [vmem:[%s2028 + $0x48] sm:%s2018]
                %2049 = vst [vmem:[%s2029 + $0x48] sm:%s2018] %v2048
                %v2050 = vld [vmem:[%s2028 + $0x50] sm:%s2018]
                %2051 = vst [vmem:[%s2029 + $0x50] sm:%s2018] %v2050
                %v2052 = vld [vmem:[%s2028 + $0x58] sm:%s2018]
                %2053 = vst [vmem:[%s2029 + $0x58] sm:%s2018] %v2052
                %v2054 = vld [vmem:[%s2028 + $0x60] sm:%s2018]
                %2055 = vst [vmem:[%s2029 + $0x60] sm:%s2018] %v2054
                %s2056 = sadd.s32 1, %s2027
                %p2057 = scmp.ge.s32.totalorder %s2056, %s2019
                %s2058 = scalar_select %p2057, 0, %s2056
                %s2059 = smul.u32 %s2058, 104
                %s2060 = smul.u32 %s2058, 104
                %s2061 = scalar_lea.vmem %s1998, %s2059 [#allocation2]
                %s2062 = scalar_lea.vmem %s2009, %s2060
              $region53: #{tpu_custom_call.1} parent=47 // loop_footer
                %s2024 = sadd.s32 %s2022, 1
              $region54: #{tpu_custom_call.1} parent=47 // loop_footer_branch
                %2021 = sbr.rel target = $region50
              $region55: #{tpu_custom_call.1} parent=47 // loop_exit
                _
              %s2063 = sdiv.u32.pop %s2005, 13
              %s2064 = srem.u32.pop %s2005, 13
              %s2065 = smul.u32 %s2063, 13
              %s2066 = smul.u32 8, %s2065
              %s2067 = scalar_lea.vmem %s1998, %s2066 [#allocation2]
              %s2068 = smul.u32 8, %s2065
              %s2069 = scalar_lea.vmem %s2009, %s2068
              // While loop
              $region56: #{tpu_custom_call.1} parent=47 // loop_pre_header
                _
              $region57: #{tpu_custom_call.1} parent=47 // loop_header
                %s2071 = sphi 0, %s2073
                %p2072 = scmp.ge.s32.totalorder %s2071, %s2064
                %s2076 = sphi 0, %s2083
                %s2077 = sphi %s2067, %s2086
                %s2078 = sphi %s2069, %s2087
              $region58: #{tpu_custom_call.1} parent=47 // loop_header_branch
                %2075 = sbr.rel (%p2072) target = $region62
              $region59: #{tpu_custom_call.1} parent=47 // loop_body
                %v2079 = vld [vmem:[%s2077] sm:%s2018]
                %2080 = vst [vmem:[%s2078] sm:%s2018] %v2079
                %s2081 = sadd.s32 1, %s2076
                %p2082 = scmp.ge.s32.totalorder %s2081, %s2064
                %s2083 = scalar_select %p2082, 0, %s2081
                %s2084 = smul.u32 %s2083, 8
                %s2085 = smul.u32 %s2083, 8
                %s2086 = scalar_lea.vmem %s2067, %s2084 [#allocation2]
                %s2087 = scalar_lea.vmem %s2069, %s2085
              $region60: #{tpu_custom_call.1} parent=47 // loop_footer
                %s2073 = sadd.s32 %s2071, 1
              $region61: #{tpu_custom_call.1} parent=47 // loop_footer_branch
                %2070 = sbr.rel target = $region57
              $region62: #{tpu_custom_call.1} parent=47 // loop_exit
                _
            $region48: #{tpu_custom_call.1} parent=39 // pred_fallthru
              _
          $region40: #{tpu_custom_call.1} parent=35 // pred_fallthru
            _
          %2161 = vnop
        $region36: #{tpu_custom_call.1} parent=31 // pred_fallthru
          _
      $region32: #{tpu_custom_call.1} parent=5 // pred_fallthru
        _
      %p2162 = scmp.le.s32.totalorder 2, %s9
      // Predicated region
      $region85: #{tpu_custom_call.1} parent=5 // pred_check
        %p2163 = pneg %p2162
      $region86: #{tpu_custom_call.1} parent=5 // pred_check_branch
        %2165 = sbr.rel (%p2163) target = $region88
      $region87: #{tpu_custom_call.1} parent=5 // pred_region
        %s2166 = ssub.s32 %s9, 2
        // Predicated region
        $region89: #{tpu_custom_call.1} parent=87 // pred_check
          %p2167 = pneg %p116
        $region90: #{tpu_custom_call.1} parent=87 // pred_check_branch
          %2169 = sbr.rel (%p2167) target = $region92
        $region91: #{tpu_custom_call.1} parent=87 // pred_region
          %s2170 = sand.u32 %s101, 1
          %s2171 = sand.u32 %s101, 1
          %s2172 = smul.addr %s2171, 104
          %s2173 = scalar_lea.vmem [#allocation2], %s2172
        $region92: #{tpu_custom_call.1} parent=87 // pred_fallthru
          _
      $region88: #{tpu_custom_call.1} parent=5 // pred_fallthru
        _
    $region6: #{tpu_custom_call.1} parent=1 // loop_footer
      %s13 = sadd.s32 1, %s9
    $region7: #{tpu_custom_call.1} parent=1 // loop_footer_branch
      %8 = sbr.rel target = $region3
    $region8: #{tpu_custom_call.1} parent=1 // loop_exit
      _

</llo_original>
